<compile_context>
chip_gen: v6e
topology: v6e:2x2x1
jax: 0.10.0
libtpu: 0.0.40
codegen_flags: <defaults>
</compile_context>

<pallas_src>
import math

import jax
import jax.numpy as jnp
from jax import lax
from jax.experimental import pallas as pl
from jax.experimental.pallas import tpu as pltpu

# ----- model hyper-params (match the PyTorch module) -----
BATCH = 2
SEQ = 8
HIDDEN = 32
NUM_HEADS = 4
GROUP_NUM = 2
HEAD_DIM = HIDDEN // NUM_HEADS          # 8
REP = NUM_HEADS // GROUP_NUM            # heads per kv group = 2
NBLK = HIDDEN // SEQ                    # 4 row-blocks of wo (quirky-view fold)
LN_EPS = 1e-5

# TODO(synk): attention_mask path (scores += mask * -1e-09) not implemented; the
#             reference forward is exercised with attention_mask=None.


def _layer_norm(x, gamma, beta, eps=LN_EPS):
    mu = jnp.mean(x, axis=-1, keepdims=True)
    var = jnp.mean((x - mu) ** 2, axis=-1, keepdims=True)
    return (x - mu) * lax.rsqrt(var + eps) * gamma + beta


# --------------------------------------------------------------------------
# Single fused kernel: QKV proj -> GQA attention -> o_linear(+quirky layout)
# -> residual+LN -> FFN -> residual+LN.  Everything stays in VMEM.
# --------------------------------------------------------------------------
def gqa_fused_kernel(x_ref, wqkv_ref, bqkv_ref, wo3_ref, bo_ref,
                     g1_ref, b1_ref, wf1_ref, bf1_ref, wf2_ref, bf2_ref,
                     g2_ref, b2_ref, out_ref, attn_ref):
    f32 = jnp.float32
    x = x_ref[...]                                                 # (B*S, H)

    # --- fused Q/K/V projection (K/V already expanded per-head on host) ---
    qkv = jnp.dot(x, wqkv_ref[...], preferred_element_type=f32) + bqkv_ref[...]

    scale = 1.0 / math.sqrt(HEAD_DIM)
    for b in range(BATCH):
        r0 = b * SEQ
        for h in range(NUM_HEADS):
            c = h * HEAD_DIM
            qh = qkv[r0:r0 + SEQ, c:c + HEAD_DIM]                           # (S, hd)
            kh = qkv[r0:r0 + SEQ, HIDDEN + c:HIDDEN + c + HEAD_DIM]         # (S, hd)
            vh = qkv[r0:r0 + SEQ, 2 * HIDDEN + c:2 * HIDDEN + c + HEAD_DIM]

            # scores = q @ k^T via contraction on head_dim (no explicit k.T)
            s = lax.dot_general(qh, kh, (((1,), (1,)), ((), ())),
                                preferred_element_type=f32) * scale         # (S, S)
            s = s - jnp.max(s, axis=-1, keepdims=True)
            e = jnp.exp(s)
            p = e * pl.reciprocal(jnp.sum(e, axis=-1, keepdims=True))       # EUP
            oh = jnp.dot(p, vh, preferred_element_type=f32)                 # (S, hd)
            # store head output as (hd, S): attn[b*H + h*hd + d, s] = oh[s, d]
            attn_ref[b * HIDDEN + c:b * HIDDEN + c + HEAD_DIM, :] = oh.T

    # --- o_linear applied to the module's quirky transpose/view layout ---
    # quirky[b, r, i*S + s] == attn[b*H + NBLK*r + i, s]      (NBLK = H // S)
    # => (quirky @ wo)[b*S + r, :] = sum_i attn[i::NBLK rows] @ wo[S*i:S*(i+1), :]
    o_acc = jnp.zeros((BATCH * SEQ, HIDDEN), f32)
    for i in range(NBLK):
        a_i = attn_ref[pl.ds(i, BATCH * SEQ, stride=NBLK), :]               # (B*S, S)
        o_acc = o_acc + jnp.dot(a_i, wo3_ref[i], preferred_element_type=f32)

    y = _layer_norm(x + o_acc + bo_ref[...], g1_ref[...], b1_ref[...])

    # --- FFN: fc1 / ReLU / fc2 + residual + LayerNorm ---
    h1 = jnp.dot(y, wf1_ref[...], preferred_element_type=f32) + bf1_ref[...]
    h1 = jnp.maximum(h1, 0.0)
    h2 = jnp.dot(h1, wf2_ref[...], preferred_element_type=f32) + bf2_ref[...]
    out_ref[...] = _layer_norm(y + h2, g2_ref[...], b2_ref[...])


def _expand_kv(w):
    """Duplicate each KV group's columns REP times (folds the GQA repeat)."""
    lead = w.shape[0]
    return jnp.repeat(w.reshape(lead, GROUP_NUM, HEAD_DIM), REP, axis=1).reshape(
        lead, NUM_HEADS * HEAD_DIM)


@jax.jit
def gqa_forward(x, params):
    B, S, H = x.shape
    x2d = x.reshape(B * S, H)

    # Fused QKV weight (H, 3H): [Wq | Wk expanded per-head | Wv expanded per-head]
    w_qkv = jnp.concatenate(
        [params["wq"], _expand_kv(params["wk"]), _expand_kv(params["wv"])], axis=1)
    b_qkv = jnp.concatenate(
        [params["bq"], _expand_kv(params["bk"]), _expand_kv(params["bv"])], axis=1)
    wo3 = params["wo"].reshape(NBLK, SEQ, H)        # row-blocks wo[8i:8i+8, :]

    out2d = pl.pallas_call(
        gqa_fused_kernel,
        out_shape=jax.ShapeDtypeStruct((B * S, H), jnp.float32),
        scratch_shapes=[pltpu.VMEM((B * H, S), jnp.float32)],
    )(x2d, w_qkv, b_qkv, wo3, params["bo"], params["g_ln"], params["b_ln"],
      params["wf1"], params["bf1"], params["wf2"], params["bf2"],
      params["g_ffn_ln"], params["b_ffn_ln"])
    return out2d.reshape(B, S, H)


# --------------------------------------------------------------------------
# Pure-JAX reference (mirrors the PyTorch forward exactly) for validation.
# --------------------------------------------------------------------------
def ref_forward(x, p):
    B, S, H = x.shape
    q = x @ p["wq"] + p["bq"][0]
    k = x @ p["wk"] + p["bk"][0]
    v = x @ p["wv"] + p["bv"][0]

    q = q.reshape(B, S, NUM_HEADS, HEAD_DIM).transpose(0, 2, 1, 3)
    k = k.reshape(B, S, GROUP_NUM, HEAD_DIM).transpose(0, 2, 1, 3)
    v = v.reshape(B, S, GROUP_NUM, HEAD_DIM).transpose(0, 2, 1, 3)
    k = jnp.repeat(k, REP, axis=1)
    v = jnp.repeat(v, REP, axis=1)

    scores = jnp.einsum("bhqd,bhkd->bhqk", q, k) / math.sqrt(HEAD_DIM)
    probs = jax.nn.softmax(scores, axis=-1)
    out = jnp.einsum("bhqk,bhkd->bhqd", probs, v)          # (B, NH, S, hd)
    out = out.transpose(0, 1, 3, 2).reshape(B, S, H)       # quirky torch reshape

    y = _layer_norm(x + out @ p["wo"] + p["bo"][0], p["g_ln"][0], p["b_ln"][0])
    h1 = jnp.maximum(y @ p["wf1"] + p["bf1"][0], 0.0)
    h2 = h1 @ p["wf2"] + p["bf2"][0]
    return _layer_norm(y + h2, p["g_ffn_ln"][0], p["b_ffn_ln"][0])


def init_params(key):
    ks = jax.random.split(key, 12)
    s = 1.0 / math.sqrt(HIDDEN)
    kv = GROUP_NUM * HEAD_DIM
    f32 = jnp.float32
    return {
        # Linear weights stored pre-transposed as (in, out)
        "wq": jax.random.normal(ks[0], (HIDDEN, HIDDEN), f32) * s,
        "bq": jax.random.normal(ks[1], (1, HIDDEN), f32) * 0.02,
        "wk": jax.random.normal(ks[2], (HIDDEN, kv), f32) * s,
        "bk": jax.random.normal(ks[3], (1, kv), f32) * 0.02,
        "wv": jax.random.normal(ks[4], (HIDDEN, kv), f32) * s,
        "bv": jax.random.normal(ks[5], (1, kv), f32) * 0.02,
        "wo": jax.random.normal(ks[6], (HIDDEN, HIDDEN), f32) * s,
        "bo": jax.random.normal(ks[7], (1, HIDDEN), f32) * 0.02,
        "g_ln": jnp.ones((1, HIDDEN), f32),
        "b_ln": jnp.zeros((1, HIDDEN), f32),
        "wf1": jax.random.normal(ks[8], (HIDDEN, HIDDEN), f32) * s,
        "bf1": jax.random.normal(ks[9], (1, HIDDEN), f32) * 0.02,
        "wf2": jax.random.normal(ks[10], (HIDDEN, HIDDEN), f32) * s,
        "bf2": jax.random.normal(ks[11], (1, HIDDEN), f32) * 0.02,
        "g_ffn_ln": jnp.ones((1, HIDDEN), f32),
        "b_ffn_ln": jnp.zeros((1, HIDDEN), f32),
    }


if __name__ == "__main__":
    key = jax.random.PRNGKey(0)
    pkey, xkey = jax.random.split(key)
    params = init_params(pkey)
    x = jax.random.normal(xkey, (BATCH, SEQ, HIDDEN), jnp.float32)

    out = gqa_forward(x, params)
    out = jax.block_until_ready(out)

    ref = ref_forward(x, params)
    assert out.shape == (BATCH, SEQ, HIDDEN)
    err = jnp.max(jnp.abs(out - ref))
    assert jnp.allclose(out, ref, atol=1e-4, rtol=1e-4), f"max err {err}"

    print("KERNEL_OK")
</pallas_src>

<mosaic_0001>
module attributes {stable_mosaic.version = 11 : i64} {
  func.func @gqa_fused_kernel(%arg0: memref<16x32xf32, #tpu.memory_space<vmem>>, %arg1: memref<32x96xf32, #tpu.memory_space<vmem>>, %arg2: memref<1x96xf32, #tpu.memory_space<vmem>>, %arg3: memref<4x8x32xf32, #tpu.memory_space<vmem>>, %arg4: memref<1x32xf32, #tpu.memory_space<vmem>>, %arg5: memref<1x32xf32, #tpu.memory_space<vmem>>, %arg6: memref<1x32xf32, #tpu.memory_space<vmem>>, %arg7: memref<32x32xf32, #tpu.memory_space<vmem>>, %arg8: memref<1x32xf32, #tpu.memory_space<vmem>>, %arg9: memref<32x32xf32, #tpu.memory_space<vmem>>, %arg10: memref<1x32xf32, #tpu.memory_space<vmem>>, %arg11: memref<1x32xf32, #tpu.memory_space<vmem>>, %arg12: memref<1x32xf32, #tpu.memory_space<vmem>>, %arg13: memref<16x32xf32, #tpu.memory_space<vmem>>, %arg14: memref<64x8xf32, #tpu.memory_space<vmem>>) attributes {dimension_semantics = [], scalar_prefetch = 0 : i64, scratch_operands = 1 : i64, tpu.core_type = #tpu.core_type<tc>} {
    %c0 = arith.constant 0 : index
    %c0_0 = arith.constant 0 : index
    %0 = vector.load %arg0[%c0, %c0_0] : memref<16x32xf32, #tpu.memory_space<vmem>>, vector<16x32xf32>
    %c0_1 = arith.constant 0 : index
    %c0_2 = arith.constant 0 : index
    %1 = vector.load %arg1[%c0_1, %c0_2] : memref<32x96xf32, #tpu.memory_space<vmem>>, vector<32x96xf32>
    %cst = arith.constant dense<0.000000e+00> : vector<16x96xf32>
    %2 = tpu.matmul %0, %1, %cst {dimension_numbers = #tpu.dot_dimension_numbers<[1], [0], [0], [1], [0, 0, 1, 1], [], []>} : vector<16x32xf32>, vector<32x96xf32>, vector<16x96xf32> -> vector<16x96xf32>
    %c0_3 = arith.constant 0 : index
    %c0_4 = arith.constant 0 : index
    %3 = vector.load %arg2[%c0_3, %c0_4] : memref<1x96xf32, #tpu.memory_space<vmem>>, vector<1x96xf32>
    %4 = vector.broadcast %3 : vector<1x96xf32> to vector<16x96xf32>
    %5 = arith.addf %2, %4 : vector<16x96xf32>
    %6 = vector.extract_strided_slice %5 {offsets = [0, 0], sizes = [8, 8], strides = [1, 1]} : vector<16x96xf32> to vector<8x8xf32>
    %7 = vector.extract_strided_slice %5 {offsets = [0, 32], sizes = [8, 8], strides = [1, 1]} : vector<16x96xf32> to vector<8x8xf32>
    %8 = vector.extract_strided_slice %5 {offsets = [0, 64], sizes = [8, 8], strides = [1, 1]} : vector<16x96xf32> to vector<8x8xf32>
    %cst_5 = arith.constant dense<0.000000e+00> : vector<8x8xf32>
    %9 = tpu.matmul %6, %7, %cst_5 {dimension_numbers = #tpu.dot_dimension_numbers<[1], [1], [0], [0], [0, 0, 1, 0], [], []>} : vector<8x8xf32>, vector<8x8xf32>, vector<8x8xf32> -> vector<8x8xf32>
    %cst_6 = arith.constant 0.353553385 : f32
    %10 = vector.broadcast %cst_6 : f32 to vector<8x8xf32>
    %11 = arith.mulf %9, %10 : vector<8x8xf32>
    %cst_7 = arith.constant dense<0xFF800000> : vector<8xf32>
    %12 = vector.multi_reduction <maximumf>, %11, %cst_7 [1] : vector<8x8xf32> to vector<8xf32>
    %13 = vector.shape_cast %12 : vector<8xf32> to vector<8x1xf32>
    %14 = vector.broadcast %13 : vector<8x1xf32> to vector<8x8xf32>
    %15 = arith.subf %11, %14 : vector<8x8xf32>
    %16 = math.exp %15 : vector<8x8xf32>
    %cst_8 = arith.constant dense<0.000000e+00> : vector<8xf32>
    %17 = vector.multi_reduction <add>, %16, %cst_8 [1] : vector<8x8xf32> to vector<8xf32>
    %18 = vector.shape_cast %17 : vector<8xf32> to vector<8x1xf32>
    %19 = tpu.reciprocal %18 : vector<8x1xf32> -> vector<8x1xf32>
    %20 = vector.broadcast %19 : vector<8x1xf32> to vector<8x8xf32>
    %21 = arith.mulf %16, %20 : vector<8x8xf32>
    %cst_9 = arith.constant dense<0.000000e+00> : vector<8x8xf32>
    %22 = tpu.matmul %21, %8, %cst_9 {dimension_numbers = #tpu.dot_dimension_numbers<[1], [0], [0], [1], [0, 0, 1, 1], [], []>} : vector<8x8xf32>, vector<8x8xf32>, vector<8x8xf32> -> vector<8x8xf32>
    %23 = tpu.transpose %22, [1, 0] : vector<8x8xf32> -> vector<8x8xf32>
    %c0_10 = arith.constant 0 : index
    %c0_11 = arith.constant 0 : index
    %24 = vector.load %arg14[%c0_10, %c0_11] : memref<64x8xf32, #tpu.memory_space<vmem>>, vector<8x8xf32>
    tpu.vector_store %arg14[%c0_10, %c0_11], %23 {strides = array<i32>} : memref<64x8xf32, #tpu.memory_space<vmem>>, vector<8x8xf32>,
    %25 = vector.extract_strided_slice %5 {offsets = [0, 8], sizes = [8, 8], strides = [1, 1]} : vector<16x96xf32> to vector<8x8xf32>
    %26 = vector.extract_strided_slice %5 {offsets = [0, 40], sizes = [8, 8], strides = [1, 1]} : vector<16x96xf32> to vector<8x8xf32>
    %27 = vector.extract_strided_slice %5 {offsets = [0, 72], sizes = [8, 8], strides = [1, 1]} : vector<16x96xf32> to vector<8x8xf32>
    %cst_12 = arith.constant dense<0.000000e+00> : vector<8x8xf32>
    %28 = tpu.matmul %25, %26, %cst_12 {dimension_numbers = #tpu.dot_dimension_numbers<[1], [1], [0], [0], [0, 0, 1, 0], [], []>} : vector<8x8xf32>, vector<8x8xf32>, vector<8x8xf32> -> vector<8x8xf32>
    %cst_13 = arith.constant 0.353553385 : f32
    %29 = vector.broadcast %cst_13 : f32 to vector<8x8xf32>
    %30 = arith.mulf %28, %29 : vector<8x8xf32>
    %cst_14 = arith.constant dense<0xFF800000> : vector<8xf32>
    %31 = vector.multi_reduction <maximumf>, %30, %cst_14 [1] : vector<8x8xf32> to vector<8xf32>
    %32 = vector.shape_cast %31 : vector<8xf32> to vector<8x1xf32>
    %33 = vector.broadcast %32 : vector<8x1xf32> to vector<8x8xf32>
    %34 = arith.subf %30, %33 : vector<8x8xf32>
    %35 = math.exp %34 : vector<8x8xf32>
    %cst_15 = arith.constant dense<0.000000e+00> : vector<8xf32>
    %36 = vector.multi_reduction <add>, %35, %cst_15 [1] : vector<8x8xf32> to vector<8xf32>
    %37 = vector.shape_cast %36 : vector<8xf32> to vector<8x1xf32>
    %38 = tpu.reciprocal %37 : vector<8x1xf32> -> vector<8x1xf32>
    %39 = vector.broadcast %38 : vector<8x1xf32> to vector<8x8xf32>
    %40 = arith.mulf %35, %39 : vector<8x8xf32>
    %cst_16 = arith.constant dense<0.000000e+00> : vector<8x8xf32>
    %41 = tpu.matmul %40, %27, %cst_16 {dimension_numbers = #tpu.dot_dimension_numbers<[1], [0], [0], [1], [0, 0, 1, 1], [], []>} : vector<8x8xf32>, vector<8x8xf32>, vector<8x8xf32> -> vector<8x8xf32>
    %42 = tpu.transpose %41, [1, 0] : vector<8x8xf32> -> vector<8x8xf32>
    %c8 = arith.constant 8 : index
    %c0_17 = arith.constant 0 : index
    %43 = vector.load %arg14[%c8, %c0_17] : memref<64x8xf32, #tpu.memory_space<vmem>>, vector<8x8xf32>
    tpu.vector_store %arg14[%c8, %c0_17], %42 {strides = array<i32>} : memref<64x8xf32, #tpu.memory_space<vmem>>, vector<8x8xf32>,
    %44 = vector.extract_strided_slice %5 {offsets = [0, 16], sizes = [8, 8], strides = [1, 1]} : vector<16x96xf32> to vector<8x8xf32>
    %45 = vector.extract_strided_slice %5 {offsets = [0, 48], sizes = [8, 8], strides = [1, 1]} : vector<16x96xf32> to vector<8x8xf32>
    %46 = vector.extract_strided_slice %5 {offsets = [0, 80], sizes = [8, 8], strides = [1, 1]} : vector<16x96xf32> to vector<8x8xf32>
    %cst_18 = arith.constant dense<0.000000e+00> : vector<8x8xf32>
    %47 = tpu.matmul %44, %45, %cst_18 {dimension_numbers = #tpu.dot_dimension_numbers<[1], [1], [0], [0], [0, 0, 1, 0], [], []>} : vector<8x8xf32>, vector<8x8xf32>, vector<8x8xf32> -> vector<8x8xf32>
    %cst_19 = arith.constant 0.353553385 : f32
    %48 = vector.broadcast %cst_19 : f32 to vector<8x8xf32>
    %49 = arith.mulf %47, %48 : vector<8x8xf32>
    %cst_20 = arith.constant dense<0xFF800000> : vector<8xf32>
    %50 = vector.multi_reduction <maximumf>, %49, %cst_20 [1] : vector<8x8xf32> to vector<8xf32>
    %51 = vector.shape_cast %50 : vector<8xf32> to vector<8x1xf32>
    %52 = vector.broadcast %51 : vector<8x1xf32> to vector<8x8xf32>
    %53 = arith.subf %49, %52 : vector<8x8xf32>
    %54 = math.exp %53 : vector<8x8xf32>
    %cst_21 = arith.constant dense<0.000000e+00> : vector<8xf32>
    %55 = vector.multi_reduction <add>, %54, %cst_21 [1] : vector<8x8xf32> to vector<8xf32>
    %56 = vector.shape_cast %55 : vector<8xf32> to vector<8x1xf32>
    %57 = tpu.reciprocal %56 : vector<8x1xf32> -> vector<8x1xf32>
    %58 = vector.broadcast %57 : vector<8x1xf32> to vector<8x8xf32>
    %59 = arith.mulf %54, %58 : vector<8x8xf32>
    %cst_22 = arith.constant dense<0.000000e+00> : vector<8x8xf32>
    %60 = tpu.matmul %59, %46, %cst_22 {dimension_numbers = #tpu.dot_dimension_numbers<[1], [0], [0], [1], [0, 0, 1, 1], [], []>} : vector<8x8xf32>, vector<8x8xf32>, vector<8x8xf32> -> vector<8x8xf32>
    %61 = tpu.transpose %60, [1, 0] : vector<8x8xf32> -> vector<8x8xf32>
    %c16 = arith.constant 16 : index
    %c0_23 = arith.constant 0 : index
    %62 = vector.load %arg14[%c16, %c0_23] : memref<64x8xf32, #tpu.memory_space<vmem>>, vector<8x8xf32>
    tpu.vector_store %arg14[%c16, %c0_23], %61 {strides = array<i32>} : memref<64x8xf32, #tpu.memory_space<vmem>>, vector<8x8xf32>,
    %63 = vector.extract_strided_slice %5 {offsets = [0, 24], sizes = [8, 8], strides = [1, 1]} : vector<16x96xf32> to vector<8x8xf32>
    %64 = vector.extract_strided_slice %5 {offsets = [0, 56], sizes = [8, 8], strides = [1, 1]} : vector<16x96xf32> to vector<8x8xf32>
    %65 = vector.extract_strided_slice %5 {offsets = [0, 88], sizes = [8, 8], strides = [1, 1]} : vector<16x96xf32> to vector<8x8xf32>
    %cst_24 = arith.constant dense<0.000000e+00> : vector<8x8xf32>
    %66 = tpu.matmul %63, %64, %cst_24 {dimension_numbers = #tpu.dot_dimension_numbers<[1], [1], [0], [0], [0, 0, 1, 0], [], []>} : vector<8x8xf32>, vector<8x8xf32>, vector<8x8xf32> -> vector<8x8xf32>
    %cst_25 = arith.constant 0.353553385 : f32
    %67 = vector.broadcast %cst_25 : f32 to vector<8x8xf32>
    %68 = arith.mulf %66, %67 : vector<8x8xf32>
    %cst_26 = arith.constant dense<0xFF800000> : vector<8xf32>
    %69 = vector.multi_reduction <maximumf>, %68, %cst_26 [1] : vector<8x8xf32> to vector<8xf32>
    %70 = vector.shape_cast %69 : vector<8xf32> to vector<8x1xf32>
    %71 = vector.broadcast %70 : vector<8x1xf32> to vector<8x8xf32>
    %72 = arith.subf %68, %71 : vector<8x8xf32>
    %73 = math.exp %72 : vector<8x8xf32>
    %cst_27 = arith.constant dense<0.000000e+00> : vector<8xf32>
    %74 = vector.multi_reduction <add>, %73, %cst_27 [1] : vector<8x8xf32> to vector<8xf32>
    %75 = vector.shape_cast %74 : vector<8xf32> to vector<8x1xf32>
    %76 = tpu.reciprocal %75 : vector<8x1xf32> -> vector<8x1xf32>
    %77 = vector.broadcast %76 : vector<8x1xf32> to vector<8x8xf32>
    %78 = arith.mulf %73, %77 : vector<8x8xf32>
    %cst_28 = arith.constant dense<0.000000e+00> : vector<8x8xf32>
    %79 = tpu.matmul %78, %65, %cst_28 {dimension_numbers = #tpu.dot_dimension_numbers<[1], [0], [0], [1], [0, 0, 1, 1], [], []>} : vector<8x8xf32>, vector<8x8xf32>, vector<8x8xf32> -> vector<8x8xf32>
    %80 = tpu.transpose %79, [1, 0] : vector<8x8xf32> -> vector<8x8xf32>
    %c24 = arith.constant 24 : index
    %c0_29 = arith.constant 0 : index
    %81 = vector.load %arg14[%c24, %c0_29] : memref<64x8xf32, #tpu.memory_space<vmem>>, vector<8x8xf32>
    tpu.vector_store %arg14[%c24, %c0_29], %80 {strides = array<i32>} : memref<64x8xf32, #tpu.memory_space<vmem>>, vector<8x8xf32>,
    %82 = vector.extract_strided_slice %5 {offsets = [8, 0], sizes = [8, 8], strides = [1, 1]} : vector<16x96xf32> to vector<8x8xf32>
    %83 = vector.extract_strided_slice %5 {offsets = [8, 32], sizes = [8, 8], strides = [1, 1]} : vector<16x96xf32> to vector<8x8xf32>
    %84 = vector.extract_strided_slice %5 {offsets = [8, 64], sizes = [8, 8], strides = [1, 1]} : vector<16x96xf32> to vector<8x8xf32>
    %cst_30 = arith.constant dense<0.000000e+00> : vector<8x8xf32>
    %85 = tpu.matmul %82, %83, %cst_30 {dimension_numbers = #tpu.dot_dimension_numbers<[1], [1], [0], [0], [0, 0, 1, 0], [], []>} : vector<8x8xf32>, vector<8x8xf32>, vector<8x8xf32> -> vector<8x8xf32>
    %cst_31 = arith.constant 0.353553385 : f32
    %86 = vector.broadcast %cst_31 : f32 to vector<8x8xf32>
    %87 = arith.mulf %85, %86 : vector<8x8xf32>
    %cst_32 = arith.constant dense<0xFF800000> : vector<8xf32>
    %88 = vector.multi_reduction <maximumf>, %87, %cst_32 [1] : vector<8x8xf32> to vector<8xf32>
    %89 = vector.shape_cast %88 : vector<8xf32> to vector<8x1xf32>
    %90 = vector.broadcast %89 : vector<8x1xf32> to vector<8x8xf32>
    %91 = arith.subf %87, %90 : vector<8x8xf32>
    %92 = math.exp %91 : vector<8x8xf32>
    %cst_33 = arith.constant dense<0.000000e+00> : vector<8xf32>
    %93 = vector.multi_reduction <add>, %92, %cst_33 [1] : vector<8x8xf32> to vector<8xf32>
    %94 = vector.shape_cast %93 : vector<8xf32> to vector<8x1xf32>
    %95 = tpu.reciprocal %94 : vector<8x1xf32> -> vector<8x1xf32>
    %96 = vector.broadcast %95 : vector<8x1xf32> to vector<8x8xf32>
    %97 = arith.mulf %92, %96 : vector<8x8xf32>
    %cst_34 = arith.constant dense<0.000000e+00> : vector<8x8xf32>
    %98 = tpu.matmul %97, %84, %cst_34 {dimension_numbers = #tpu.dot_dimension_numbers<[1], [0], [0], [1], [0, 0, 1, 1], [], []>} : vector<8x8xf32>, vector<8x8xf32>, vector<8x8xf32> -> vector<8x8xf32>
    %99 = tpu.transpose %98, [1, 0] : vector<8x8xf32> -> vector<8x8xf32>
    %c32 = arith.constant 32 : index
    %c0_35 = arith.constant 0 : index
    %100 = vector.load %arg14[%c32, %c0_35] : memref<64x8xf32, #tpu.memory_space<vmem>>, vector<8x8xf32>
    tpu.vector_store %arg14[%c32, %c0_35], %99 {strides = array<i32>} : memref<64x8xf32, #tpu.memory_space<vmem>>, vector<8x8xf32>,
    %101 = vector.extract_strided_slice %5 {offsets = [8, 8], sizes = [8, 8], strides = [1, 1]} : vector<16x96xf32> to vector<8x8xf32>
    %102 = vector.extract_strided_slice %5 {offsets = [8, 40], sizes = [8, 8], strides = [1, 1]} : vector<16x96xf32> to vector<8x8xf32>
    %103 = vector.extract_strided_slice %5 {offsets = [8, 72], sizes = [8, 8], strides = [1, 1]} : vector<16x96xf32> to vector<8x8xf32>
    %cst_36 = arith.constant dense<0.000000e+00> : vector<8x8xf32>
    %104 = tpu.matmul %101, %102, %cst_36 {dimension_numbers = #tpu.dot_dimension_numbers<[1], [1], [0], [0], [0, 0, 1, 0], [], []>} : vector<8x8xf32>, vector<8x8xf32>, vector<8x8xf32> -> vector<8x8xf32>
    %cst_37 = arith.constant 0.353553385 : f32
    %105 = vector.broadcast %cst_37 : f32 to vector<8x8xf32>
    %106 = arith.mulf %104, %105 : vector<8x8xf32>
    %cst_38 = arith.constant dense<0xFF800000> : vector<8xf32>
    %107 = vector.multi_reduction <maximumf>, %106, %cst_38 [1] : vector<8x8xf32> to vector<8xf32>
    %108 = vector.shape_cast %107 : vector<8xf32> to vector<8x1xf32>
    %109 = vector.broadcast %108 : vector<8x1xf32> to vector<8x8xf32>
    %110 = arith.subf %106, %109 : vector<8x8xf32>
    %111 = math.exp %110 : vector<8x8xf32>
    %cst_39 = arith.constant dense<0.000000e+00> : vector<8xf32>
    %112 = vector.multi_reduction <add>, %111, %cst_39 [1] : vector<8x8xf32> to vector<8xf32>
    %113 = vector.shape_cast %112 : vector<8xf32> to vector<8x1xf32>
    %114 = tpu.reciprocal %113 : vector<8x1xf32> -> vector<8x1xf32>
    %115 = vector.broadcast %114 : vector<8x1xf32> to vector<8x8xf32>
    %116 = arith.mulf %111, %115 : vector<8x8xf32>
    %cst_40 = arith.constant dense<0.000000e+00> : vector<8x8xf32>
    %117 = tpu.matmul %116, %103, %cst_40 {dimension_numbers = #tpu.dot_dimension_numbers<[1], [0], [0], [1], [0, 0, 1, 1], [], []>} : vector<8x8xf32>, vector<8x8xf32>, vector<8x8xf32> -> vector<8x8xf32>
    %118 = tpu.transpose %117, [1, 0] : vector<8x8xf32> -> vector<8x8xf32>
    %c40 = arith.constant 40 : index
    %c0_41 = arith.constant 0 : index
    %119 = vector.load %arg14[%c40, %c0_41] : memref<64x8xf32, #tpu.memory_space<vmem>>, vector<8x8xf32>
    tpu.vector_store %arg14[%c40, %c0_41], %118 {strides = array<i32>} : memref<64x8xf32, #tpu.memory_space<vmem>>, vector<8x8xf32>,
    %120 = vector.extract_strided_slice %5 {offsets = [8, 16], sizes = [8, 8], strides = [1, 1]} : vector<16x96xf32> to vector<8x8xf32>
    %121 = vector.extract_strided_slice %5 {offsets = [8, 48], sizes = [8, 8], strides = [1, 1]} : vector<16x96xf32> to vector<8x8xf32>
    %122 = vector.extract_strided_slice %5 {offsets = [8, 80], sizes = [8, 8], strides = [1, 1]} : vector<16x96xf32> to vector<8x8xf32>
    %cst_42 = arith.constant dense<0.000000e+00> : vector<8x8xf32>
    %123 = tpu.matmul %120, %121, %cst_42 {dimension_numbers = #tpu.dot_dimension_numbers<[1], [1], [0], [0], [0, 0, 1, 0], [], []>} : vector<8x8xf32>, vector<8x8xf32>, vector<8x8xf32> -> vector<8x8xf32>
    %cst_43 = arith.constant 0.353553385 : f32
    %124 = vector.broadcast %cst_43 : f32 to vector<8x8xf32>
    %125 = arith.mulf %123, %124 : vector<8x8xf32>
    %cst_44 = arith.constant dense<0xFF800000> : vector<8xf32>
    %126 = vector.multi_reduction <maximumf>, %125, %cst_44 [1] : vector<8x8xf32> to vector<8xf32>
    %127 = vector.shape_cast %126 : vector<8xf32> to vector<8x1xf32>
    %128 = vector.broadcast %127 : vector<8x1xf32> to vector<8x8xf32>
    %129 = arith.subf %125, %128 : vector<8x8xf32>
    %130 = math.exp %129 : vector<8x8xf32>
    %cst_45 = arith.constant dense<0.000000e+00> : vector<8xf32>
    %131 = vector.multi_reduction <add>, %130, %cst_45 [1] : vector<8x8xf32> to vector<8xf32>
    %132 = vector.shape_cast %131 : vector<8xf32> to vector<8x1xf32>
    %133 = tpu.reciprocal %132 : vector<8x1xf32> -> vector<8x1xf32>
    %134 = vector.broadcast %133 : vector<8x1xf32> to vector<8x8xf32>
    %135 = arith.mulf %130, %134 : vector<8x8xf32>
    %cst_46 = arith.constant dense<0.000000e+00> : vector<8x8xf32>
    %136 = tpu.matmul %135, %122, %cst_46 {dimension_numbers = #tpu.dot_dimension_numbers<[1], [0], [0], [1], [0, 0, 1, 1], [], []>} : vector<8x8xf32>, vector<8x8xf32>, vector<8x8xf32> -> vector<8x8xf32>
    %137 = tpu.transpose %136, [1, 0] : vector<8x8xf32> -> vector<8x8xf32>
    %c48 = arith.constant 48 : index
    %c0_47 = arith.constant 0 : index
    %138 = vector.load %arg14[%c48, %c0_47] : memref<64x8xf32, #tpu.memory_space<vmem>>, vector<8x8xf32>
    tpu.vector_store %arg14[%c48, %c0_47], %137 {strides = array<i32>} : memref<64x8xf32, #tpu.memory_space<vmem>>, vector<8x8xf32>,
    %139 = vector.extract_strided_slice %5 {offsets = [8, 24], sizes = [8, 8], strides = [1, 1]} : vector<16x96xf32> to vector<8x8xf32>
    %140 = vector.extract_strided_slice %5 {offsets = [8, 56], sizes = [8, 8], strides = [1, 1]} : vector<16x96xf32> to vector<8x8xf32>
    %141 = vector.extract_strided_slice %5 {offsets = [8, 88], sizes = [8, 8], strides = [1, 1]} : vector<16x96xf32> to vector<8x8xf32>
    %cst_48 = arith.constant dense<0.000000e+00> : vector<8x8xf32>
    %142 = tpu.matmul %139, %140, %cst_48 {dimension_numbers = #tpu.dot_dimension_numbers<[1], [1], [0], [0], [0, 0, 1, 0], [], []>} : vector<8x8xf32>, vector<8x8xf32>, vector<8x8xf32> -> vector<8x8xf32>
    %cst_49 = arith.constant 0.353553385 : f32
    %143 = vector.broadcast %cst_49 : f32 to vector<8x8xf32>
    %144 = arith.mulf %142, %143 : vector<8x8xf32>
    %cst_50 = arith.constant dense<0xFF800000> : vector<8xf32>
    %145 = vector.multi_reduction <maximumf>, %144, %cst_50 [1] : vector<8x8xf32> to vector<8xf32>
    %146 = vector.shape_cast %145 : vector<8xf32> to vector<8x1xf32>
    %147 = vector.broadcast %146 : vector<8x1xf32> to vector<8x8xf32>
    %148 = arith.subf %144, %147 : vector<8x8xf32>
    %149 = math.exp %148 : vector<8x8xf32>
    %cst_51 = arith.constant dense<0.000000e+00> : vector<8xf32>
    %150 = vector.multi_reduction <add>, %149, %cst_51 [1] : vector<8x8xf32> to vector<8xf32>
    %151 = vector.shape_cast %150 : vector<8xf32> to vector<8x1xf32>
    %152 = tpu.reciprocal %151 : vector<8x1xf32> -> vector<8x1xf32>
    %153 = vector.broadcast %152 : vector<8x1xf32> to vector<8x8xf32>
    %154 = arith.mulf %149, %153 : vector<8x8xf32>
    %cst_52 = arith.constant dense<0.000000e+00> : vector<8x8xf32>
    %155 = tpu.matmul %154, %141, %cst_52 {dimension_numbers = #tpu.dot_dimension_numbers<[1], [0], [0], [1], [0, 0, 1, 1], [], []>} : vector<8x8xf32>, vector<8x8xf32>, vector<8x8xf32> -> vector<8x8xf32>
    %156 = tpu.transpose %155, [1, 0] : vector<8x8xf32> -> vector<8x8xf32>
    %c56 = arith.constant 56 : index
    %c0_53 = arith.constant 0 : index
    %157 = vector.load %arg14[%c56, %c0_53] : memref<64x8xf32, #tpu.memory_space<vmem>>, vector<8x8xf32>
    tpu.vector_store %arg14[%c56, %c0_53], %156 {strides = array<i32>} : memref<64x8xf32, #tpu.memory_space<vmem>>, vector<8x8xf32>,
    %cst_54 = arith.constant 0.000000e+00 : f32
    %158 = vector.broadcast %cst_54 : f32 to vector<16x32xf32>
    %c0_55 = arith.constant 0 : index
    %c0_56 = arith.constant 0 : index
    %159 = tpu.strided_load %arg14[%c0_55, %c0_56] {strides = array<i32: 4, 1>} : memref<64x8xf32, #tpu.memory_space<vmem>>, vector<16x8xf32>
    %c0_57 = arith.constant 0 : index
    %c0_58 = arith.constant 0 : index
    %c0_59 = arith.constant 0 : index
    %160 = vector.load %arg3[%c0_57, %c0_58, %c0_59] : memref<4x8x32xf32, #tpu.memory_space<vmem>>, vector<1x8x32xf32>
    %161 = vector.shape_cast %160 : vector<1x8x32xf32> to vector<8x32xf32>
    %cst_60 = arith.constant dense<0.000000e+00> : vector<16x32xf32>
    %162 = tpu.matmul %159, %161, %cst_60 {dimension_numbers = #tpu.dot_dimension_numbers<[1], [0], [0], [1], [0, 0, 1, 1], [], []>} : vector<16x8xf32>, vector<8x32xf32>, vector<16x32xf32> -> vector<16x32xf32>
    %163 = arith.addf %158, %162 : vector<16x32xf32>
    %c1 = arith.constant 1 : index
    %c0_61 = arith.constant 0 : index
    %164 = tpu.strided_load %arg14[%c1, %c0_61] {strides = array<i32: 4, 1>} : memref<64x8xf32, #tpu.memory_space<vmem>>, vector<16x8xf32>
    %c1_62 = arith.constant 1 : index
    %c0_63 = arith.constant 0 : index
    %c0_64 = arith.constant 0 : index
    %165 = vector.load %arg3[%c1_62, %c0_63, %c0_64] : memref<4x8x32xf32, #tpu.memory_space<vmem>>, vector<1x8x32xf32>
    %166 = vector.shape_cast %165 : vector<1x8x32xf32> to vector<8x32xf32>
    %cst_65 = arith.constant dense<0.000000e+00> : vector<16x32xf32>
    %167 = tpu.matmul %164, %166, %cst_65 {dimension_numbers = #tpu.dot_dimension_numbers<[1], [0], [0], [1], [0, 0, 1, 1], [], []>} : vector<16x8xf32>, vector<8x32xf32>, vector<16x32xf32> -> vector<16x32xf32>
    %168 = arith.addf %163, %167 : vector<16x32xf32>
    %c2 = arith.constant 2 : index
    %c0_66 = arith.constant 0 : index
    %169 = tpu.strided_load %arg14[%c2, %c0_66] {strides = array<i32: 4, 1>} : memref<64x8xf32, #tpu.memory_space<vmem>>, vector<16x8xf32>
    %c2_67 = arith.constant 2 : index
    %c0_68 = arith.constant 0 : index
    %c0_69 = arith.constant 0 : index
    %170 = vector.load %arg3[%c2_67, %c0_68, %c0_69] : memref<4x8x32xf32, #tpu.memory_space<vmem>>, vector<1x8x32xf32>
    %171 = vector.shape_cast %170 : vector<1x8x32xf32> to vector<8x32xf32>
    %cst_70 = arith.constant dense<0.000000e+00> : vector<16x32xf32>
    %172 = tpu.matmul %169, %171, %cst_70 {dimension_numbers = #tpu.dot_dimension_numbers<[1], [0], [0], [1], [0, 0, 1, 1], [], []>} : vector<16x8xf32>, vector<8x32xf32>, vector<16x32xf32> -> vector<16x32xf32>
    %173 = arith.addf %168, %172 : vector<16x32xf32>
    %c3 = arith.constant 3 : index
    %c0_71 = arith.constant 0 : index
    %174 = tpu.strided_load %arg14[%c3, %c0_71] {strides = array<i32: 4, 1>} : memref<64x8xf32, #tpu.memory_space<vmem>>, vector<16x8xf32>
    %c3_72 = arith.constant 3 : index
    %c0_73 = arith.constant 0 : index
    %c0_74 = arith.constant 0 : index
    %175 = vector.load %arg3[%c3_72, %c0_73, %c0_74] : memref<4x8x32xf32, #tpu.memory_space<vmem>>, vector<1x8x32xf32>
    %176 = vector.shape_cast %175 : vector<1x8x32xf32> to vector<8x32xf32>
    %cst_75 = arith.constant dense<0.000000e+00> : vector<16x32xf32>
    %177 = tpu.matmul %174, %176, %cst_75 {dimension_numbers = #tpu.dot_dimension_numbers<[1], [0], [0], [1], [0, 0, 1, 1], [], []>} : vector<16x8xf32>, vector<8x32xf32>, vector<16x32xf32> -> vector<16x32xf32>
    %178 = arith.addf %173, %177 : vector<16x32xf32>
    %179 = arith.addf %0, %178 : vector<16x32xf32>
    %c0_76 = arith.constant 0 : index
    %c0_77 = arith.constant 0 : index
    %180 = vector.load %arg4[%c0_76, %c0_77] : memref<1x32xf32, #tpu.memory_space<vmem>>, vector<1x32xf32>
    %181 = vector.broadcast %180 : vector<1x32xf32> to vector<16x32xf32>
    %182 = arith.addf %179, %181 : vector<16x32xf32>
    %c0_78 = arith.constant 0 : index
    %c0_79 = arith.constant 0 : index
    %183 = vector.load %arg5[%c0_78, %c0_79] : memref<1x32xf32, #tpu.memory_space<vmem>>, vector<1x32xf32>
    %c0_80 = arith.constant 0 : index
    %c0_81 = arith.constant 0 : index
    %184 = vector.load %arg6[%c0_80, %c0_81] : memref<1x32xf32, #tpu.memory_space<vmem>>, vector<1x32xf32>
    %cst_82 = arith.constant dense<0.000000e+00> : vector<16xf32>
    %185 = vector.multi_reduction <add>, %182, %cst_82 [1] : vector<16x32xf32> to vector<16xf32>
    %186 = vector.shape_cast %185 : vector<16xf32> to vector<16x1xf32>
    %cst_83 = arith.constant 3.200000e+01 : f32
    %187 = vector.broadcast %cst_83 : f32 to vector<16x1xf32>
    %188 = arith.divf %186, %187 : vector<16x1xf32>
    %189 = vector.broadcast %188 : vector<16x1xf32> to vector<16x32xf32>
    %190 = arith.subf %182, %189 : vector<16x32xf32>
    %191 = arith.mulf %190, %190 : vector<16x32xf32>
    %cst_84 = arith.constant dense<0.000000e+00> : vector<16xf32>
    %192 = vector.multi_reduction <add>, %191, %cst_84 [1] : vector<16x32xf32> to vector<16xf32>
    %193 = vector.shape_cast %192 : vector<16xf32> to vector<16x1xf32>
    %cst_85 = arith.constant 3.200000e+01 : f32
    %194 = vector.broadcast %cst_85 : f32 to vector<16x1xf32>
    %195 = arith.divf %193, %194 : vector<16x1xf32>
    %196 = vector.broadcast %188 : vector<16x1xf32> to vector<16x32xf32>
    %197 = arith.subf %182, %196 : vector<16x32xf32>
    %cst_86 = arith.constant 9.99999974E-6 : f32
    %198 = vector.broadcast %cst_86 : f32 to vector<16x1xf32>
    %199 = arith.addf %195, %198 : vector<16x1xf32>
    %200 = math.rsqrt %199 : vector<16x1xf32>
    %201 = vector.broadcast %200 : vector<16x1xf32> to vector<16x32xf32>
    %202 = arith.mulf %197, %201 : vector<16x32xf32>
    %203 = vector.broadcast %183 : vector<1x32xf32> to vector<16x32xf32>
    %204 = arith.mulf %202, %203 : vector<16x32xf32>
    %205 = vector.broadcast %184 : vector<1x32xf32> to vector<16x32xf32>
    %206 = arith.addf %204, %205 : vector<16x32xf32>
    %c0_87 = arith.constant 0 : index
    %c0_88 = arith.constant 0 : index
    %207 = vector.load %arg7[%c0_87, %c0_88] : memref<32x32xf32, #tpu.memory_space<vmem>>, vector<32x32xf32>
    %cst_89 = arith.constant dense<0.000000e+00> : vector<16x32xf32>
    %208 = tpu.matmul %206, %207, %cst_89 {dimension_numbers = #tpu.dot_dimension_numbers<[1], [0], [0], [1], [0, 0, 1, 1], [], []>} : vector<16x32xf32>, vector<32x32xf32>, vector<16x32xf32> -> vector<16x32xf32>
    %c0_90 = arith.constant 0 : index
    %c0_91 = arith.constant 0 : index
    %209 = vector.load %arg8[%c0_90, %c0_91] : memref<1x32xf32, #tpu.memory_space<vmem>>, vector<1x32xf32>
    %210 = vector.broadcast %209 : vector<1x32xf32> to vector<16x32xf32>
    %211 = arith.addf %208, %210 : vector<16x32xf32>
    %cst_92 = arith.constant 0.000000e+00 : f32
    %212 = vector.broadcast %cst_92 : f32 to vector<16x32xf32>
    %213 = arith.maximumf %211, %212 : vector<16x32xf32>
    %c0_93 = arith.constant 0 : index
    %c0_94 = arith.constant 0 : index
    %214 = vector.load %arg9[%c0_93, %c0_94] : memref<32x32xf32, #tpu.memory_space<vmem>>, vector<32x32xf32>
    %cst_95 = arith.constant dense<0.000000e+00> : vector<16x32xf32>
    %215 = tpu.matmul %213, %214, %cst_95 {dimension_numbers = #tpu.dot_dimension_numbers<[1], [0], [0], [1], [0, 0, 1, 1], [], []>} : vector<16x32xf32>, vector<32x32xf32>, vector<16x32xf32> -> vector<16x32xf32>
    %c0_96 = arith.constant 0 : index
    %c0_97 = arith.constant 0 : index
    %216 = vector.load %arg10[%c0_96, %c0_97] : memref<1x32xf32, #tpu.memory_space<vmem>>, vector<1x32xf32>
    %217 = vector.broadcast %216 : vector<1x32xf32> to vector<16x32xf32>
    %218 = arith.addf %215, %217 : vector<16x32xf32>
    %219 = arith.addf %206, %218 : vector<16x32xf32>
    %c0_98 = arith.constant 0 : index
    %c0_99 = arith.constant 0 : index
    %220 = vector.load %arg11[%c0_98, %c0_99] : memref<1x32xf32, #tpu.memory_space<vmem>>, vector<1x32xf32>
    %c0_100 = arith.constant 0 : index
    %c0_101 = arith.constant 0 : index
    %221 = vector.load %arg12[%c0_100, %c0_101] : memref<1x32xf32, #tpu.memory_space<vmem>>, vector<1x32xf32>
    %cst_102 = arith.constant dense<0.000000e+00> : vector<16xf32>
    %222 = vector.multi_reduction <add>, %219, %cst_102 [1] : vector<16x32xf32> to vector<16xf32>
    %223 = vector.shape_cast %222 : vector<16xf32> to vector<16x1xf32>
    %cst_103 = arith.constant 3.200000e+01 : f32
    %224 = vector.broadcast %cst_103 : f32 to vector<16x1xf32>
    %225 = arith.divf %223, %224 : vector<16x1xf32>
    %226 = vector.broadcast %225 : vector<16x1xf32> to vector<16x32xf32>
    %227 = arith.subf %219, %226 : vector<16x32xf32>
    %228 = arith.mulf %227, %227 : vector<16x32xf32>
    %cst_104 = arith.constant dense<0.000000e+00> : vector<16xf32>
    %229 = vector.multi_reduction <add>, %228, %cst_104 [1] : vector<16x32xf32> to vector<16xf32>
    %230 = vector.shape_cast %229 : vector<16xf32> to vector<16x1xf32>
    %cst_105 = arith.constant 3.200000e+01 : f32
    %231 = vector.broadcast %cst_105 : f32 to vector<16x1xf32>
    %232 = arith.divf %230, %231 : vector<16x1xf32>
    %233 = vector.broadcast %225 : vector<16x1xf32> to vector<16x32xf32>
    %234 = arith.subf %219, %233 : vector<16x32xf32>
    %cst_106 = arith.constant 9.99999974E-6 : f32
    %235 = vector.broadcast %cst_106 : f32 to vector<16x1xf32>
    %236 = arith.addf %232, %235 : vector<16x1xf32>
    %237 = math.rsqrt %236 : vector<16x1xf32>
    %238 = vector.broadcast %237 : vector<16x1xf32> to vector<16x32xf32>
    %239 = arith.mulf %234, %238 : vector<16x32xf32>
    %240 = vector.broadcast %220 : vector<1x32xf32> to vector<16x32xf32>
    %241 = arith.mulf %239, %240 : vector<16x32xf32>
    %242 = vector.broadcast %221 : vector<1x32xf32> to vector<16x32xf32>
    %243 = arith.addf %241, %242 : vector<16x32xf32>
    %c0_107 = arith.constant 0 : index
    %c0_108 = arith.constant 0 : index
    %244 = vector.load %arg13[%c0_107, %c0_108] : memref<16x32xf32, #tpu.memory_space<vmem>>, vector<16x32xf32>
    tpu.vector_store %arg13[%c0_107, %c0_108], %243 {strides = array<i32>} : memref<16x32xf32, #tpu.memory_space<vmem>>, vector<16x32xf32>,
    return
  }
}

</mosaic_0001>

<llo_original>
// kernel: gqa_forward.1
$region0: #{gqa_forward.1}
  #allocation0 [shape = 'u32[]', space=smem, size = 0x4, offset = 0x4, fixed_abs, tag = 'smem constant byte address 0x4 - core index']
  #allocation1 [shape = 'u32[144,128]{1,0:T(1,128)}', space=vmem, size = 0x12000, scoped, tag = 'internal scratch']
  #allocation2 [shape = 'f32[64,8]{1,0:T(8,128)}', space=vmem, size = 0x8000, scoped, tag = 'scratch operand']
  %s0 = inlined_call_operand.vmem [shape: f32[16,32], index: 0, kind: input, shape index: {}]
  %s1 = inlined_call_operand.vmem [shape: f32[32,96], index: 1, kind: input, shape index: {}]
  %s2 = inlined_call_operand.vmem [shape: f32[1,96], index: 2, kind: input, shape index: {}]
  %s3 = inlined_call_operand.vmem [shape: f32[4,8,32], index: 3, kind: input, shape index: {}]
  %s4 = inlined_call_operand.vmem [shape: f32[1,32], index: 4, kind: input, shape index: {}]
  %s5 = inlined_call_operand.vmem [shape: f32[1,32], index: 5, kind: input, shape index: {}]
  %s6 = inlined_call_operand.vmem [shape: f32[1,32], index: 6, kind: input, shape index: {}]
  %s7 = inlined_call_operand.vmem [shape: f32[32,32], index: 7, kind: input, shape index: {}]
  %s8 = inlined_call_operand.vmem [shape: f32[1,32], index: 8, kind: input, shape index: {}]
  %s9 = inlined_call_operand.vmem [shape: f32[32,32], index: 9, kind: input, shape index: {}]
  %s10 = inlined_call_operand.vmem [shape: f32[1,32], index: 10, kind: input, shape index: {}]
  %s11 = inlined_call_operand.vmem [shape: f32[1,32], index: 11, kind: input, shape index: {}]
  %s12 = inlined_call_operand.vmem [shape: f32[1,32], index: 12, kind: input, shape index: {}]
  %s13 = inlined_call_operand.hbm [shape: f32[16,32], index: 13, kind: output, shape index: {}]
  %s14 = sld [smem:[#allocation0]]
  $region62: #{gqa_forward.1} parent=0
    _
  %s16 = ssub.s32 1, %s14
  %s17 = scalar_select 0, %s16, %s14
  $region1: #{gqa_forward.1} parent=0
    #allocation3 [shape = 'u8[8192]{0}', space=vmem, size = 0x2000, scoped, tag = 'output window, operand 0, single buffered']
    #allocation4 [shape = 's32[1]{0}', space=sflag, size = 0x4, scoped, tag = 'scoped memory for gqa_forward.1']
    %18 = vsyncpa [#allocation4], 0
    // Predicated region
    $region2: #{gqa_forward.1} parent=1 // pred_check
      _
    $region3: #{gqa_forward.1} parent=1 // pred_check_branch
      %20 = sbr.rel (0) target = $region5
    $region4: #{gqa_forward.1} parent=1 // pred_region
      _
    $region5: #{gqa_forward.1} parent=1 // pred_fallthru
      _
    // Predicated region
    $region6: #{gqa_forward.1} parent=1 // pred_check
      _
    $region7: #{gqa_forward.1} parent=1 // pred_check_branch
      %22 = sbr.rel (0) target = $region9
    $region8: #{gqa_forward.1} parent=1 // pred_region
      _
    $region9: #{gqa_forward.1} parent=1 // pred_fallthru
      _
    // Predicated region
    $region10: #{gqa_forward.1} parent=1 // pred_check
      _
    $region11: #{gqa_forward.1} parent=1 // pred_check_branch
      %24 = sbr.rel (0) target = $region13
    $region12: #{gqa_forward.1} parent=1 // pred_region
      _
    $region13: #{gqa_forward.1} parent=1 // pred_fallthru
      _
    // Predicated region
    $region14: #{gqa_forward.1} parent=1 // pred_check
      _
    $region15: #{gqa_forward.1} parent=1 // pred_check_branch
      %26 = sbr.rel (0) target = $region17
    $region16: #{gqa_forward.1} parent=1 // pred_region
      _
    $region17: #{gqa_forward.1} parent=1 // pred_fallthru
      _
    // Predicated region
    $region18: #{gqa_forward.1} parent=1 // pred_check
      _
    $region19: #{gqa_forward.1} parent=1 // pred_check_branch
      %28 = sbr.rel (0) target = $region21
    $region20: #{gqa_forward.1} parent=1 // pred_region
      _
    $region21: #{gqa_forward.1} parent=1 // pred_fallthru
      _
    // Predicated region
    $region22: #{gqa_forward.1} parent=1 // pred_check
      _
    $region23: #{gqa_forward.1} parent=1 // pred_check_branch
      %30 = sbr.rel (0) target = $region25
    $region24: #{gqa_forward.1} parent=1 // pred_region
      _
    $region25: #{gqa_forward.1} parent=1 // pred_fallthru
      _
    // Predicated region
    $region26: #{gqa_forward.1} parent=1 // pred_check
      _
    $region27: #{gqa_forward.1} parent=1 // pred_check_branch
      %32 = sbr.rel (0) target = $region29
    $region28: #{gqa_forward.1} parent=1 // pred_region
      _
    $region29: #{gqa_forward.1} parent=1 // pred_fallthru
      _
    // Predicated region
    $region30: #{gqa_forward.1} parent=1 // pred_check
      _
    $region31: #{gqa_forward.1} parent=1 // pred_check_branch
      %34 = sbr.rel (0) target = $region33
    $region32: #{gqa_forward.1} parent=1 // pred_region
      _
    $region33: #{gqa_forward.1} parent=1 // pred_fallthru
      _
    // Predicated region
    $region34: #{gqa_forward.1} parent=1 // pred_check
      _
    $region35: #{gqa_forward.1} parent=1 // pred_check_branch
      %36 = sbr.rel (0) target = $region37
    $region36: #{gqa_forward.1} parent=1 // pred_region
      _
    $region37: #{gqa_forward.1} parent=1 // pred_fallthru
      _
    // Predicated region
    $region38: #{gqa_forward.1} parent=1 // pred_check
      _
    $region39: #{gqa_forward.1} parent=1 // pred_check_branch
      %38 = sbr.rel (0) target = $region41
    $region40: #{gqa_forward.1} parent=1 // pred_region
      _
    $region41: #{gqa_forward.1} parent=1 // pred_fallthru
      _
    // Predicated region
    $region42: #{gqa_forward.1} parent=1 // pred_check
      _
    $region43: #{gqa_forward.1} parent=1 // pred_check_branch
      %40 = sbr.rel (0) target = $region45
    $region44: #{gqa_forward.1} parent=1 // pred_region
      _
    $region45: #{gqa_forward.1} parent=1 // pred_fallthru
      _
    // Predicated region
    $region46: #{gqa_forward.1} parent=1 // pred_check
      _
    $region47: #{gqa_forward.1} parent=1 // pred_check_branch
      %42 = sbr.rel (0) target = $region49
    $region48: #{gqa_forward.1} parent=1 // pred_region
      _
    $region49: #{gqa_forward.1} parent=1 // pred_fallthru
      _
    // Predicated region
    $region50: #{gqa_forward.1} parent=1 // pred_check
      _
    $region51: #{gqa_forward.1} parent=1 // pred_check_branch
      %44 = sbr.rel (0) target = $region53
    $region52: #{gqa_forward.1} parent=1 // pred_region
      _
    $region53: #{gqa_forward.1} parent=1 // pred_fallthru
      _
    %v45 = vld [vmem:[%s0] sm:$0xff]
    %v46 = vld [vmem:[%s0 + $0x8] sm:$0xff]
    %v47 = vld [vmem:[%s1] sm:$0xff]
    %v48 = vld [vmem:[%s1 + $0x8] sm:$0xff]
    %v49 = vld [vmem:[%s1 + $0x10] sm:$0xff]
    %v50 = vld [vmem:[%s1 + $0x18] sm:$0xff]
    %v51 = vld [vmem:[%s2] sm:$0x1]
    %v53 = vlaneseq
    %v54 = vshrl.u32 %v53, 7
    %v55 = vsub.s32 0, %v54
    %v56 = vrot.slane %v51, %v55
    %vm58 = vcmask 261120
    %v60 = vsel %vm58, %v45, 0
    %v63 = vsel %vm58, %v46, 0
    %65 = vmatprep.subr.mxu0 0.0
    %66 = vmatpush1.msra.mxu0 0.0
    %67 = vmatprep.subr.mxu0 0.0
    %68 = vmatpush1.msra.mxu0 0.0
    %69 = vmatprep.subr.mxu0 0.0
    %70 = vmatpush1.msra.mxu0 0.0
    %71 = vmatprep.subr.mxu0 0.0
    %72 = vmatpush1.msra.mxu0 0.0
    %73 = vmatprep.subr.mxu0 0.0
    %74 = vmatpush1.msra.mxu0 0.0
    %75 = vmatprep.subr.mxu0 0.0
    %76 = vmatpush1.msra.mxu0 0.0
    %77 = vmatprep.subr.mxu0 0.0
    %78 = vmatpush1.msra.mxu0 0.0
    %79 = vmatprep.subr.mxu0 0.0
    %80 = vmatpush1.msra.mxu0 0.0
    %81 = vmatprep.subr.mxu0 0.0
    %82 = vmatpush1.msra.mxu0 0.0
    %83 = vmatprep.subr.mxu0 0.0
    %84 = vmatpush1.msra.mxu0 0.0
    %85 = vmatprep.subr.mxu0 0.0
    %86 = vmatpush1.msra.mxu0 0.0
    %87 = vmatprep.subr.mxu0 0.0
    %88 = vmatpush1.msra.mxu0 0.0
    %89 = vmatprep.subr.mxu0 0.0
    %90 = vmatpush1.msra.mxu0 %v50
    %91 = vmatprep.subr.mxu0 0.0
    %92 = vmatpush1.msra.mxu0 %v49
    %93 = vmatprep.subr.mxu0 0.0
    %94 = vmatpush1.msra.mxu0 %v48
    %95 = vmatprep.subr.mxu0 0.0
    %96 = vmatpush1.msra.mxu0 %v47
    %97 = vmatprep.subr.mxu0 0.0
    %98 = vmatpush2.msra.mxu0 0.0
    %99 = vmatprep.subr.mxu0 0.0
    %100 = vmatpush2.msra.mxu0 0.0
    %101 = vmatprep.subr.mxu0 0.0
    %102 = vmatpush2.msra.mxu0 0.0
    %103 = vmatprep.subr.mxu0 0.0
    %104 = vmatpush2.msra.mxu0 0.0
    %105 = vmatprep.subr.mxu0 0.0
    %106 = vmatpush2.msra.mxu0 0.0
    %107 = vmatprep.subr.mxu0 0.0
    %108 = vmatpush2.msra.mxu0 0.0
    %109 = vmatprep.subr.mxu0 0.0
    %110 = vmatpush2.msra.mxu0 0.0
    %111 = vmatprep.subr.mxu0 0.0
    %112 = vmatpush2.msra.mxu0 0.0
    %113 = vmatprep.subr.mxu0 0.0
    %114 = vmatpush2.msra.mxu0 0.0
    %115 = vmatprep.subr.mxu0 0.0
    %116 = vmatpush2.msra.mxu0 0.0
    %117 = vmatprep.subr.mxu0 0.0
    %118 = vmatpush2.msra.mxu0 0.0
    %119 = vmatprep.subr.mxu0 0.0
    %120 = vmatpush2.msra.mxu0 0.0
    %121 = vmatprep.subr.mxu0 0.0
    %122 = vmatpush2.msra.mxu0 0.0
    %123 = vmatprep.subr.mxu0 0.0
    %124 = vmatpush2.msra.mxu0 0.0
    %125 = vmatprep.subr.mxu0 0.0
    %126 = vmatpush2.msra.mxu0 0.0
    %127 = vmatprep.subr.mxu0 0.0
    %128 = vmatpush2.msra.mxu0 0.0
    %129 = vmatprep.mubr.f32.mxu0 0.0
    %130 = vmatmul.mubr.f32.gmra.mxu0 %v60
    %v131 = vpop.f32.mrf.mxu0
    %v132 = vadd.f32 %v56, %v131
    %v133 = vpop.f32.mrf.mxu0
    %134 = vmatprep.mubr.f32.mxu0 0.0
    %135 = vmatmul.mubr.f32.gmra.mxu0 %v63
    %v136 = vpop.f32.mrf.mxu0
    %v137 = vadd.f32 %v56, %v136
    %v138 = vpop.f32.mrf.mxu0
    %139 = vdwg.mxu0
    %141 = vrot.lane.b32.xlu0 %v132, 96
    %v142 = vpop.permute.xlu0 %141
    %vm143 = vcmask 64512
    %v144 = vsel %vm143, %v132, 0
    %v146 = vsel %vm143, %v142, 0
    %148 = vmatprep.subr.mxu0 0.0
    %149 = vmatpush1.xpose.msra.mxu0 0.0
    %150 = vmatprep.subr.mxu0 0.0
    %151 = vmatpush1.xpose.msra.mxu0 0.0
    %152 = vmatprep.subr.mxu0 0.0
    %153 = vmatpush1.xpose.msra.mxu0 0.0
    %154 = vmatprep.subr.mxu0 0.0
    %155 = vmatpush1.xpose.msra.mxu0 0.0
    %156 = vmatprep.subr.mxu0 0.0
    %157 = vmatpush1.xpose.msra.mxu0 0.0
    %158 = vmatprep.subr.mxu0 0.0
    %159 = vmatpush1.xpose.msra.mxu0 0.0
    %160 = vmatprep.subr.mxu0 0.0
    %161 = vmatpush1.xpose.msra.mxu0 0.0
    %162 = vmatprep.subr.mxu0 0.0
    %163 = vmatpush1.xpose.msra.mxu0 0.0
    %164 = vmatprep.subr.mxu0 0.0
    %165 = vmatpush1.xpose.msra.mxu0 0.0
    %166 = vmatprep.subr.mxu0 0.0
    %167 = vmatpush1.xpose.msra.mxu0 0.0
    %168 = vmatprep.subr.mxu0 0.0
    %169 = vmatpush1.xpose.msra.mxu0 0.0
    %170 = vmatprep.subr.mxu0 0.0
    %171 = vmatpush1.xpose.msra.mxu0 0.0
    %172 = vmatprep.subr.mxu0 0.0
    %173 = vmatpush1.xpose.msra.mxu0 0.0
    %174 = vmatprep.subr.mxu0 0.0
    %175 = vmatpush1.xpose.msra.mxu0 0.0
    %176 = vmatprep.subr.mxu0 0.0
    %177 = vmatpush1.xpose.msra.mxu0 0.0
    %178 = vmatprep.subr.mxu0 0.0
    %179 = vmatpush1.xpose.msra.mxu0 %v146
    %180 = vmatprep.subr.mxu0 0.0
    %181 = vmatpush2.xpose.msra.mxu0 0.0
    %182 = vmatprep.subr.mxu0 0.0
    %183 = vmatpush2.xpose.msra.mxu0 0.0
    %184 = vmatprep.subr.mxu0 0.0
    %185 = vmatpush2.xpose.msra.mxu0 0.0
    %186 = vmatprep.subr.mxu0 0.0
    %187 = vmatpush2.xpose.msra.mxu0 0.0
    %188 = vmatprep.subr.mxu0 0.0
    %189 = vmatpush2.xpose.msra.mxu0 0.0
    %190 = vmatprep.subr.mxu0 0.0
    %191 = vmatpush2.xpose.msra.mxu0 0.0
    %192 = vmatprep.subr.mxu0 0.0
    %193 = vmatpush2.xpose.msra.mxu0 0.0
    %194 = vmatprep.subr.mxu0 0.0
    %195 = vmatpush2.xpose.msra.mxu0 0.0
    %196 = vmatprep.subr.mxu0 0.0
    %197 = vmatpush2.xpose.msra.mxu0 0.0
    %198 = vmatprep.subr.mxu0 0.0
    %199 = vmatpush2.xpose.msra.mxu0 0.0
    %200 = vmatprep.subr.mxu0 0.0
    %201 = vmatpush2.xpose.msra.mxu0 0.0
    %202 = vmatprep.subr.mxu0 0.0
    %203 = vmatpush2.xpose.msra.mxu0 0.0
    %204 = vmatprep.subr.mxu0 0.0
    %205 = vmatpush2.xpose.msra.mxu0 0.0
    %206 = vmatprep.subr.mxu0 0.0
    %207 = vmatpush2.xpose.msra.mxu0 0.0
    %208 = vmatprep.subr.mxu0 0.0
    %209 = vmatpush2.xpose.msra.mxu0 0.0
    %210 = vmatprep.subr.mxu0 0.0
    %211 = vmatpush2.xpose.msra.mxu0 0.0
    %212 = vmatprep.mubr.f32.mxu0 0.0
    %213 = vmatmul.mubr.f32.gmra.mxu0 %v144
    %v214 = vpop.f32.mrf.mxu0
    %v215 = vadd.f32 0.0, %v214
    %v216 = vpop.f32.mrf.mxu0
    %217 = vdwg.mxu0
    %v218 = vmul.f32 %v215, 0.35355338
    %v219 = vsel %vm143, %v218, -inf
    %220 = vmax.xlane.f32.xlu0 %v219
    %v221 = vpop.xlane.xlu0 %220
    %v222 = vsub.f32 %v218, %v221
    %v223 = vmul.f32 %v222, 1.442695
    %v224 = vpow.pop %v223
    %v225 = vsel %vm143, %v224, 0.0
    %226 = vadd.xlane.f32.xlu0 %v225
    %v227 = vpop.xlane.xlu0 %226
    %v228 = vrcp.pop %v227
    %v229 = vmul.f32 %v224, %v228
    %230 = vrot.lane.b32.xlu0 %v132, 64
    %v231 = vpop.permute.xlu0 %230
    %v234 = vsel %vm143, %v229, 0
    %236 = vmatprep.subr.mxu0 0.0
    %237 = vmatpush1.msra.mxu0 0.0
    %238 = vmatprep.subr.mxu0 0.0
    %239 = vmatpush1.msra.mxu0 0.0
    %240 = vmatprep.subr.mxu0 0.0
    %241 = vmatpush1.msra.mxu0 0.0
    %242 = vmatprep.subr.mxu0 0.0
    %243 = vmatpush1.msra.mxu0 0.0
    %244 = vmatprep.subr.mxu0 0.0
    %245 = vmatpush1.msra.mxu0 0.0
    %246 = vmatprep.subr.mxu0 0.0
    %247 = vmatpush1.msra.mxu0 0.0
    %248 = vmatprep.subr.mxu0 0.0
    %249 = vmatpush1.msra.mxu0 0.0
    %250 = vmatprep.subr.mxu0 0.0
    %251 = vmatpush1.msra.mxu0 0.0
    %252 = vmatprep.subr.mxu0 0.0
    %253 = vmatpush1.msra.mxu0 0.0
    %254 = vmatprep.subr.mxu0 0.0
    %255 = vmatpush1.msra.mxu0 0.0
    %256 = vmatprep.subr.mxu0 0.0
    %257 = vmatpush1.msra.mxu0 0.0
    %258 = vmatprep.subr.mxu0 0.0
    %259 = vmatpush1.msra.mxu0 0.0
    %260 = vmatprep.subr.mxu0 0.0
    %261 = vmatpush1.msra.mxu0 0.0
    %262 = vmatprep.subr.mxu0 0.0
    %263 = vmatpush1.msra.mxu0 0.0
    %264 = vmatprep.subr.mxu0 0.0
    %265 = vmatpush1.msra.mxu0 0.0
    %266 = vmatprep.subr.mxu0 0.0
    %267 = vmatpush1.msra.mxu0 %v231
    %268 = vmatprep.subr.mxu0 0.0
    %269 = vmatpush2.msra.mxu0 0.0
    %270 = vmatprep.subr.mxu0 0.0
    %271 = vmatpush2.msra.mxu0 0.0
    %272 = vmatprep.subr.mxu0 0.0
    %273 = vmatpush2.msra.mxu0 0.0
    %274 = vmatprep.subr.mxu0 0.0
    %275 = vmatpush2.msra.mxu0 0.0
    %276 = vmatprep.subr.mxu0 0.0
    %277 = vmatpush2.msra.mxu0 0.0
    %278 = vmatprep.subr.mxu0 0.0
    %279 = vmatpush2.msra.mxu0 0.0
    %280 = vmatprep.subr.mxu0 0.0
    %281 = vmatpush2.msra.mxu0 0.0
    %282 = vmatprep.subr.mxu0 0.0
    %283 = vmatpush2.msra.mxu0 0.0
    %284 = vmatprep.subr.mxu0 0.0
    %285 = vmatpush2.msra.mxu0 0.0
    %286 = vmatprep.subr.mxu0 0.0
    %287 = vmatpush2.msra.mxu0 0.0
    %288 = vmatprep.subr.mxu0 0.0
    %289 = vmatpush2.msra.mxu0 0.0
    %290 = vmatprep.subr.mxu0 0.0
    %291 = vmatpush2.msra.mxu0 0.0
    %292 = vmatprep.subr.mxu0 0.0
    %293 = vmatpush2.msra.mxu0 0.0
    %294 = vmatprep.subr.mxu0 0.0
    %295 = vmatpush2.msra.mxu0 0.0
    %296 = vmatprep.subr.mxu0 0.0
    %297 = vmatpush2.msra.mxu0 0.0
    %298 = vmatprep.subr.mxu0 0.0
    %299 = vmatpush2.msra.mxu0 0.0
    %300 = vmatprep.mubr.f32.mxu0 0.0
    %301 = vmatmul.mubr.f32.gmra.mxu0 %v234
    %v302 = vpop.f32.mrf.mxu0
    %v303 = vadd.f32 0.0, %v302
    %v304 = vpop.f32.mrf.mxu0
    %305 = vdwg.mxu0
    %306 = vxpose.xlu0.b32.start [1/16] %v303, 128
    %307 = vxpose.xlu0.b32.cont [2/16] 0.0, 128
    %308 = vxpose.xlu0.b32.cont [3/16] 0.0, 128
    %309 = vxpose.xlu0.b32.cont [4/16] 0.0, 128
    %310 = vxpose.xlu0.b32.cont [5/16] 0.0, 128
    %311 = vxpose.xlu0.b32.cont [6/16] 0.0, 128
    %312 = vxpose.xlu0.b32.cont [7/16] 0.0, 128
    %313 = vxpose.xlu0.b32.cont [8/16] 0.0, 128
    %314 = vxpose.xlu0.b32.cont [9/16] 0.0, 128
    %315 = vxpose.xlu0.b32.cont [10/16] 0.0, 128
    %316 = vxpose.xlu0.b32.cont [11/16] 0.0, 128
    %317 = vxpose.xlu0.b32.cont [12/16] 0.0, 128
    %318 = vxpose.xlu0.b32.cont [13/16] 0.0, 128
    %319 = vxpose.xlu0.b32.cont [14/16] 0.0, 128
    %320 = vxpose.xlu0.b32.cont [15/16] 0.0, 128
    %321 = vxpose.xlu0.b32.end [16/16] 0.0, 128
    %v322 = vpop.trf.xlu0
    %v323 = vpop.trf.xlu0
    %v324 = vpop.trf.xlu0
    %v325 = vpop.trf.xlu0
    %v326 = vpop.trf.xlu0
    %v327 = vpop.trf.xlu0
    %v328 = vpop.trf.xlu0
    %v329 = vpop.trf.xlu0
    %v330 = vpop.trf.xlu0
    %v331 = vpop.trf.xlu0
    %v332 = vpop.trf.xlu0
    %v333 = vpop.trf.xlu0
    %v334 = vpop.trf.xlu0
    %v335 = vpop.trf.xlu0
    %v336 = vpop.trf.xlu0
    %v337 = vpop.trf.xlu0
    %338 = vst.msk [vmem:[#allocation2] sm:$0xff] %vm143, %v322
    %339 = vrot.lane.b32.xlu0 %v132, 120
    %v340 = vpop.permute.xlu0 %339
    %341 = vrot.lane.b32.xlu0 %v132, 88
    %v342 = vpop.permute.xlu0 %341
    %v343 = vsel %vm143, %v340, 0
    %v345 = vsel %vm143, %v342, 0
    %347 = vmatprep.subr.mxu0 0.0
    %348 = vmatpush1.xpose.msra.mxu0 0.0
    %349 = vmatprep.subr.mxu0 0.0
    %350 = vmatpush1.xpose.msra.mxu0 0.0
    %351 = vmatprep.subr.mxu0 0.0
    %352 = vmatpush1.xpose.msra.mxu0 0.0
    %353 = vmatprep.subr.mxu0 0.0
    %354 = vmatpush1.xpose.msra.mxu0 0.0
    %355 = vmatprep.subr.mxu0 0.0
    %356 = vmatpush1.xpose.msra.mxu0 0.0
    %357 = vmatprep.subr.mxu0 0.0
    %358 = vmatpush1.xpose.msra.mxu0 0.0
    %359 = vmatprep.subr.mxu0 0.0
    %360 = vmatpush1.xpose.msra.mxu0 0.0
    %361 = vmatprep.subr.mxu0 0.0
    %362 = vmatpush1.xpose.msra.mxu0 0.0
    %363 = vmatprep.subr.mxu0 0.0
    %364 = vmatpush1.xpose.msra.mxu0 0.0
    %365 = vmatprep.subr.mxu0 0.0
    %366 = vmatpush1.xpose.msra.mxu0 0.0
    %367 = vmatprep.subr.mxu0 0.0
    %368 = vmatpush1.xpose.msra.mxu0 0.0
    %369 = vmatprep.subr.mxu0 0.0
    %370 = vmatpush1.xpose.msra.mxu0 0.0
    %371 = vmatprep.subr.mxu0 0.0
    %372 = vmatpush1.xpose.msra.mxu0 0.0
    %373 = vmatprep.subr.mxu0 0.0
    %374 = vmatpush1.xpose.msra.mxu0 0.0
    %375 = vmatprep.subr.mxu0 0.0
    %376 = vmatpush1.xpose.msra.mxu0 0.0
    %377 = vmatprep.subr.mxu0 0.0
    %378 = vmatpush1.xpose.msra.mxu0 %v345
    %379 = vmatprep.subr.mxu0 0.0
    %380 = vmatpush2.xpose.msra.mxu0 0.0
    %381 = vmatprep.subr.mxu0 0.0
    %382 = vmatpush2.xpose.msra.mxu0 0.0
    %383 = vmatprep.subr.mxu0 0.0
    %384 = vmatpush2.xpose.msra.mxu0 0.0
    %385 = vmatprep.subr.mxu0 0.0
    %386 = vmatpush2.xpose.msra.mxu0 0.0
    %387 = vmatprep.subr.mxu0 0.0
    %388 = vmatpush2.xpose.msra.mxu0 0.0
    %389 = vmatprep.subr.mxu0 0.0
    %390 = vmatpush2.xpose.msra.mxu0 0.0
    %391 = vmatprep.subr.mxu0 0.0
    %392 = vmatpush2.xpose.msra.mxu0 0.0
    %393 = vmatprep.subr.mxu0 0.0
    %394 = vmatpush2.xpose.msra.mxu0 0.0
    %395 = vmatprep.subr.mxu0 0.0
    %396 = vmatpush2.xpose.msra.mxu0 0.0
    %397 = vmatprep.subr.mxu0 0.0
    %398 = vmatpush2.xpose.msra.mxu0 0.0
    %399 = vmatprep.subr.mxu0 0.0
    %400 = vmatpush2.xpose.msra.mxu0 0.0
    %401 = vmatprep.subr.mxu0 0.0
    %402 = vmatpush2.xpose.msra.mxu0 0.0
    %403 = vmatprep.subr.mxu0 0.0
    %404 = vmatpush2.xpose.msra.mxu0 0.0
    %405 = vmatprep.subr.mxu0 0.0
    %406 = vmatpush2.xpose.msra.mxu0 0.0
    %407 = vmatprep.subr.mxu0 0.0
    %408 = vmatpush2.xpose.msra.mxu0 0.0
    %409 = vmatprep.subr.mxu0 0.0
    %410 = vmatpush2.xpose.msra.mxu0 0.0
    %411 = vmatprep.mubr.f32.mxu0 0.0
    %412 = vmatmul.mubr.f32.gmra.mxu0 %v343
    %v413 = vpop.f32.mrf.mxu0
    %v414 = vadd.f32 0.0, %v413
    %v415 = vpop.f32.mrf.mxu0
    %416 = vdwg.mxu0
    %v417 = vmul.f32 %v414, 0.35355338
    %v418 = vsel %vm143, %v417, -inf
    %419 = vmax.xlane.f32.xlu0 %v418
    %v420 = vpop.xlane.xlu0 %419
    %v421 = vsub.f32 %v417, %v420
    %v422 = vmul.f32 %v421, 1.442695
    %v423 = vpow.pop %v422
    %v424 = vsel %vm143, %v423, 0.0
    %425 = vadd.xlane.f32.xlu0 %v424
    %v426 = vpop.xlane.xlu0 %425
    %v427 = vrcp.pop %v426
    %v428 = vmul.f32 %v423, %v427
    %429 = vrot.lane.b32.xlu0 %v132, 56
    %v430 = vpop.permute.xlu0 %429
    %v433 = vsel %vm143, %v428, 0
    %435 = vmatprep.subr.mxu0 0.0
    %436 = vmatpush1.msra.mxu0 0.0
    %437 = vmatprep.subr.mxu0 0.0
    %438 = vmatpush1.msra.mxu0 0.0
    %439 = vmatprep.subr.mxu0 0.0
    %440 = vmatpush1.msra.mxu0 0.0
    %441 = vmatprep.subr.mxu0 0.0
    %442 = vmatpush1.msra.mxu0 0.0
    %443 = vmatprep.subr.mxu0 0.0
    %444 = vmatpush1.msra.mxu0 0.0
    %445 = vmatprep.subr.mxu0 0.0
    %446 = vmatpush1.msra.mxu0 0.0
    %447 = vmatprep.subr.mxu0 0.0
    %448 = vmatpush1.msra.mxu0 0.0
    %449 = vmatprep.subr.mxu0 0.0
    %450 = vmatpush1.msra.mxu0 0.0
    %451 = vmatprep.subr.mxu0 0.0
    %452 = vmatpush1.msra.mxu0 0.0
    %453 = vmatprep.subr.mxu0 0.0
    %454 = vmatpush1.msra.mxu0 0.0
    %455 = vmatprep.subr.mxu0 0.0
    %456 = vmatpush1.msra.mxu0 0.0
    %457 = vmatprep.subr.mxu0 0.0
    %458 = vmatpush1.msra.mxu0 0.0
    %459 = vmatprep.subr.mxu0 0.0
    %460 = vmatpush1.msra.mxu0 0.0
    %461 = vmatprep.subr.mxu0 0.0
    %462 = vmatpush1.msra.mxu0 0.0
    %463 = vmatprep.subr.mxu0 0.0
    %464 = vmatpush1.msra.mxu0 0.0
    %465 = vmatprep.subr.mxu0 0.0
    %466 = vmatpush1.msra.mxu0 %v430
    %467 = vmatprep.subr.mxu0 0.0
    %468 = vmatpush2.msra.mxu0 0.0
    %469 = vmatprep.subr.mxu0 0.0
    %470 = vmatpush2.msra.mxu0 0.0
    %471 = vmatprep.subr.mxu0 0.0
    %472 = vmatpush2.msra.mxu0 0.0
    %473 = vmatprep.subr.mxu0 0.0
    %474 = vmatpush2.msra.mxu0 0.0
    %475 = vmatprep.subr.mxu0 0.0
    %476 = vmatpush2.msra.mxu0 0.0
    %477 = vmatprep.subr.mxu0 0.0
    %478 = vmatpush2.msra.mxu0 0.0
    %479 = vmatprep.subr.mxu0 0.0
    %480 = vmatpush2.msra.mxu0 0.0
    %481 = vmatprep.subr.mxu0 0.0
    %482 = vmatpush2.msra.mxu0 0.0
    %483 = vmatprep.subr.mxu0 0.0
    %484 = vmatpush2.msra.mxu0 0.0
    %485 = vmatprep.subr.mxu0 0.0
    %486 = vmatpush2.msra.mxu0 0.0
    %487 = vmatprep.subr.mxu0 0.0
    %488 = vmatpush2.msra.mxu0 0.0
    %489 = vmatprep.subr.mxu0 0.0
    %490 = vmatpush2.msra.mxu0 0.0
    %491 = vmatprep.subr.mxu0 0.0
    %492 = vmatpush2.msra.mxu0 0.0
    %493 = vmatprep.subr.mxu0 0.0
    %494 = vmatpush2.msra.mxu0 0.0
    %495 = vmatprep.subr.mxu0 0.0
    %496 = vmatpush2.msra.mxu0 0.0
    %497 = vmatprep.subr.mxu0 0.0
    %498 = vmatpush2.msra.mxu0 0.0
    %499 = vmatprep.mubr.f32.mxu0 0.0
    %500 = vmatmul.mubr.f32.gmra.mxu0 %v433
    %v501 = vpop.f32.mrf.mxu0
    %v502 = vadd.f32 0.0, %v501
    %v503 = vpop.f32.mrf.mxu0
    %504 = vdwg.mxu0
    %505 = vxpose.xlu0.b32.start [1/16] %v502, 128
    %506 = vxpose.xlu0.b32.cont [2/16] 0.0, 128
    %507 = vxpose.xlu0.b32.cont [3/16] 0.0, 128
    %508 = vxpose.xlu0.b32.cont [4/16] 0.0, 128
    %509 = vxpose.xlu0.b32.cont [5/16] 0.0, 128
    %510 = vxpose.xlu0.b32.cont [6/16] 0.0, 128
    %511 = vxpose.xlu0.b32.cont [7/16] 0.0, 128
    %512 = vxpose.xlu0.b32.cont [8/16] 0.0, 128
    %513 = vxpose.xlu0.b32.cont [9/16] 0.0, 128
    %514 = vxpose.xlu0.b32.cont [10/16] 0.0, 128
    %515 = vxpose.xlu0.b32.cont [11/16] 0.0, 128
    %516 = vxpose.xlu0.b32.cont [12/16] 0.0, 128
    %517 = vxpose.xlu0.b32.cont [13/16] 0.0, 128
    %518 = vxpose.xlu0.b32.cont [14/16] 0.0, 128
    %519 = vxpose.xlu0.b32.cont [15/16] 0.0, 128
    %520 = vxpose.xlu0.b32.end [16/16] 0.0, 128
    %v521 = vpop.trf.xlu0
    %v522 = vpop.trf.xlu0
    %v523 = vpop.trf.xlu0
    %v524 = vpop.trf.xlu0
    %v525 = vpop.trf.xlu0
    %v526 = vpop.trf.xlu0
    %v527 = vpop.trf.xlu0
    %v528 = vpop.trf.xlu0
    %v529 = vpop.trf.xlu0
    %v530 = vpop.trf.xlu0
    %v531 = vpop.trf.xlu0
    %v532 = vpop.trf.xlu0
    %v533 = vpop.trf.xlu0
    %v534 = vpop.trf.xlu0
    %v535 = vpop.trf.xlu0
    %v536 = vpop.trf.xlu0
    %537 = vst.msk [vmem:[#allocation2 + $0x8] sm:$0xff] %vm143, %v521
    %538 = vrot.lane.b32.xlu0 %v132, 112
    %v539 = vpop.permute.xlu0 %538
    %540 = vrot.lane.b32.xlu0 %v132, 80
    %v541 = vpop.permute.xlu0 %540
    %v542 = vsel %vm143, %v539, 0
    %v544 = vsel %vm143, %v541, 0
    %546 = vmatprep.subr.mxu0 0.0
    %547 = vmatpush1.xpose.msra.mxu0 0.0
    %548 = vmatprep.subr.mxu0 0.0
    %549 = vmatpush1.xpose.msra.mxu0 0.0
    %550 = vmatprep.subr.mxu0 0.0
    %551 = vmatpush1.xpose.msra.mxu0 0.0
    %552 = vmatprep.subr.mxu0 0.0
    %553 = vmatpush1.xpose.msra.mxu0 0.0
    %554 = vmatprep.subr.mxu0 0.0
    %555 = vmatpush1.xpose.msra.mxu0 0.0
    %556 = vmatprep.subr.mxu0 0.0
    %557 = vmatpush1.xpose.msra.mxu0 0.0
    %558 = vmatprep.subr.mxu0 0.0
    %559 = vmatpush1.xpose.msra.mxu0 0.0
    %560 = vmatprep.subr.mxu0 0.0
    %561 = vmatpush1.xpose.msra.mxu0 0.0
    %562 = vmatprep.subr.mxu0 0.0
    %563 = vmatpush1.xpose.msra.mxu0 0.0
    %564 = vmatprep.subr.mxu0 0.0
    %565 = vmatpush1.xpose.msra.mxu0 0.0
    %566 = vmatprep.subr.mxu0 0.0
    %567 = vmatpush1.xpose.msra.mxu0 0.0
    %568 = vmatprep.subr.mxu0 0.0
    %569 = vmatpush1.xpose.msra.mxu0 0.0
    %570 = vmatprep.subr.mxu0 0.0
    %571 = vmatpush1.xpose.msra.mxu0 0.0
    %572 = vmatprep.subr.mxu0 0.0
    %573 = vmatpush1.xpose.msra.mxu0 0.0
    %574 = vmatprep.subr.mxu0 0.0
    %575 = vmatpush1.xpose.msra.mxu0 0.0
    %576 = vmatprep.subr.mxu0 0.0
    %577 = vmatpush1.xpose.msra.mxu0 %v544
    %578 = vmatprep.subr.mxu0 0.0
    %579 = vmatpush2.xpose.msra.mxu0 0.0
    %580 = vmatprep.subr.mxu0 0.0
    %581 = vmatpush2.xpose.msra.mxu0 0.0
    %582 = vmatprep.subr.mxu0 0.0
    %583 = vmatpush2.xpose.msra.mxu0 0.0
    %584 = vmatprep.subr.mxu0 0.0
    %585 = vmatpush2.xpose.msra.mxu0 0.0
    %586 = vmatprep.subr.mxu0 0.0
    %587 = vmatpush2.xpose.msra.mxu0 0.0
    %588 = vmatprep.subr.mxu0 0.0
    %589 = vmatpush2.xpose.msra.mxu0 0.0
    %590 = vmatprep.subr.mxu0 0.0
    %591 = vmatpush2.xpose.msra.mxu0 0.0
    %592 = vmatprep.subr.mxu0 0.0
    %593 = vmatpush2.xpose.msra.mxu0 0.0
    %594 = vmatprep.subr.mxu0 0.0
    %595 = vmatpush2.xpose.msra.mxu0 0.0
    %596 = vmatprep.subr.mxu0 0.0
    %597 = vmatpush2.xpose.msra.mxu0 0.0
    %598 = vmatprep.subr.mxu0 0.0
    %599 = vmatpush2.xpose.msra.mxu0 0.0
    %600 = vmatprep.subr.mxu0 0.0
    %601 = vmatpush2.xpose.msra.mxu0 0.0
    %602 = vmatprep.subr.mxu0 0.0
    %603 = vmatpush2.xpose.msra.mxu0 0.0
    %604 = vmatprep.subr.mxu0 0.0
    %605 = vmatpush2.xpose.msra.mxu0 0.0
    %606 = vmatprep.subr.mxu0 0.0
    %607 = vmatpush2.xpose.msra.mxu0 0.0
    %608 = vmatprep.subr.mxu0 0.0
    %609 = vmatpush2.xpose.msra.mxu0 0.0
    %610 = vmatprep.mubr.f32.mxu0 0.0
    %611 = vmatmul.mubr.f32.gmra.mxu0 %v542
    %v612 = vpop.f32.mrf.mxu0
    %v613 = vadd.f32 0.0, %v612
    %v614 = vpop.f32.mrf.mxu0
    %615 = vdwg.mxu0
    %v616 = vmul.f32 %v613, 0.35355338
    %v617 = vsel %vm143, %v616, -inf
    %618 = vmax.xlane.f32.xlu0 %v617
    %v619 = vpop.xlane.xlu0 %618
    %v620 = vsub.f32 %v616, %v619
    %v621 = vmul.f32 %v620, 1.442695
    %v622 = vpow.pop %v621
    %v623 = vsel %vm143, %v622, 0.0
    %624 = vadd.xlane.f32.xlu0 %v623
    %v625 = vpop.xlane.xlu0 %624
    %v626 = vrcp.pop %v625
    %v627 = vmul.f32 %v622, %v626
    %628 = vrot.lane.b32.xlu0 %v132, 48
    %v629 = vpop.permute.xlu0 %628
    %v632 = vsel %vm143, %v627, 0
    %634 = vmatprep.subr.mxu0 0.0
    %635 = vmatpush1.msra.mxu0 0.0
    %636 = vmatprep.subr.mxu0 0.0
    %637 = vmatpush1.msra.mxu0 0.0
    %638 = vmatprep.subr.mxu0 0.0
    %639 = vmatpush1.msra.mxu0 0.0
    %640 = vmatprep.subr.mxu0 0.0
    %641 = vmatpush1.msra.mxu0 0.0
    %642 = vmatprep.subr.mxu0 0.0
    %643 = vmatpush1.msra.mxu0 0.0
    %644 = vmatprep.subr.mxu0 0.0
    %645 = vmatpush1.msra.mxu0 0.0
    %646 = vmatprep.subr.mxu0 0.0
    %647 = vmatpush1.msra.mxu0 0.0
    %648 = vmatprep.subr.mxu0 0.0
    %649 = vmatpush1.msra.mxu0 0.0
    %650 = vmatprep.subr.mxu0 0.0
    %651 = vmatpush1.msra.mxu0 0.0
    %652 = vmatprep.subr.mxu0 0.0
    %653 = vmatpush1.msra.mxu0 0.0
    %654 = vmatprep.subr.mxu0 0.0
    %655 = vmatpush1.msra.mxu0 0.0
    %656 = vmatprep.subr.mxu0 0.0
    %657 = vmatpush1.msra.mxu0 0.0
    %658 = vmatprep.subr.mxu0 0.0
    %659 = vmatpush1.msra.mxu0 0.0
    %660 = vmatprep.subr.mxu0 0.0
    %661 = vmatpush1.msra.mxu0 0.0
    %662 = vmatprep.subr.mxu0 0.0
    %663 = vmatpush1.msra.mxu0 0.0
    %664 = vmatprep.subr.mxu0 0.0
    %665 = vmatpush1.msra.mxu0 %v629
    %666 = vmatprep.subr.mxu0 0.0
    %667 = vmatpush2.msra.mxu0 0.0
    %668 = vmatprep.subr.mxu0 0.0
    %669 = vmatpush2.msra.mxu0 0.0
    %670 = vmatprep.subr.mxu0 0.0
    %671 = vmatpush2.msra.mxu0 0.0
    %672 = vmatprep.subr.mxu0 0.0
    %673 = vmatpush2.msra.mxu0 0.0
    %674 = vmatprep.subr.mxu0 0.0
    %675 = vmatpush2.msra.mxu0 0.0
    %676 = vmatprep.subr.mxu0 0.0
    %677 = vmatpush2.msra.mxu0 0.0
    %678 = vmatprep.subr.mxu0 0.0
    %679 = vmatpush2.msra.mxu0 0.0
    %680 = vmatprep.subr.mxu0 0.0
    %681 = vmatpush2.msra.mxu0 0.0
    %682 = vmatprep.subr.mxu0 0.0
    %683 = vmatpush2.msra.mxu0 0.0
    %684 = vmatprep.subr.mxu0 0.0
    %685 = vmatpush2.msra.mxu0 0.0
    %686 = vmatprep.subr.mxu0 0.0
    %687 = vmatpush2.msra.mxu0 0.0
    %688 = vmatprep.subr.mxu0 0.0
    %689 = vmatpush2.msra.mxu0 0.0
    %690 = vmatprep.subr.mxu0 0.0
    %691 = vmatpush2.msra.mxu0 0.0
    %692 = vmatprep.subr.mxu0 0.0
    %693 = vmatpush2.msra.mxu0 0.0
    %694 = vmatprep.subr.mxu0 0.0
    %695 = vmatpush2.msra.mxu0 0.0
    %696 = vmatprep.subr.mxu0 0.0
    %697 = vmatpush2.msra.mxu0 0.0
    %698 = vmatprep.mubr.f32.mxu0 0.0
    %699 = vmatmul.mubr.f32.gmra.mxu0 %v632
    %v700 = vpop.f32.mrf.mxu0
    %v701 = vadd.f32 0.0, %v700
    %v702 = vpop.f32.mrf.mxu0
    %703 = vdwg.mxu0
    %704 = vxpose.xlu0.b32.start [1/16] %v701, 128
    %705 = vxpose.xlu0.b32.cont [2/16] 0.0, 128
    %706 = vxpose.xlu0.b32.cont [3/16] 0.0, 128
    %707 = vxpose.xlu0.b32.cont [4/16] 0.0, 128
    %708 = vxpose.xlu0.b32.cont [5/16] 0.0, 128
    %709 = vxpose.xlu0.b32.cont [6/16] 0.0, 128
    %710 = vxpose.xlu0.b32.cont [7/16] 0.0, 128
    %711 = vxpose.xlu0.b32.cont [8/16] 0.0, 128
    %712 = vxpose.xlu0.b32.cont [9/16] 0.0, 128
    %713 = vxpose.xlu0.b32.cont [10/16] 0.0, 128
    %714 = vxpose.xlu0.b32.cont [11/16] 0.0, 128
    %715 = vxpose.xlu0.b32.cont [12/16] 0.0, 128
    %716 = vxpose.xlu0.b32.cont [13/16] 0.0, 128
    %717 = vxpose.xlu0.b32.cont [14/16] 0.0, 128
    %718 = vxpose.xlu0.b32.cont [15/16] 0.0, 128
    %719 = vxpose.xlu0.b32.end [16/16] 0.0, 128
    %v720 = vpop.trf.xlu0
    %v721 = vpop.trf.xlu0
    %v722 = vpop.trf.xlu0
    %v723 = vpop.trf.xlu0
    %v724 = vpop.trf.xlu0
    %v725 = vpop.trf.xlu0
    %v726 = vpop.trf.xlu0
    %v727 = vpop.trf.xlu0
    %v728 = vpop.trf.xlu0
    %v729 = vpop.trf.xlu0
    %v730 = vpop.trf.xlu0
    %v731 = vpop.trf.xlu0
    %v732 = vpop.trf.xlu0
    %v733 = vpop.trf.xlu0
    %v734 = vpop.trf.xlu0
    %v735 = vpop.trf.xlu0
    %736 = vst.msk [vmem:[#allocation2 + $0x10] sm:$0xff] %vm143, %v720
    %737 = vrot.lane.b32.xlu0 %v132, 104
    %v738 = vpop.permute.xlu0 %737
    %739 = vrot.lane.b32.xlu0 %v132, 72
    %v740 = vpop.permute.xlu0 %739
    %v741 = vsel %vm143, %v738, 0
    %v743 = vsel %vm143, %v740, 0
    %745 = vmatprep.subr.mxu0 0.0
    %746 = vmatpush1.xpose.msra.mxu0 0.0
    %747 = vmatprep.subr.mxu0 0.0
    %748 = vmatpush1.xpose.msra.mxu0 0.0
    %749 = vmatprep.subr.mxu0 0.0
    %750 = vmatpush1.xpose.msra.mxu0 0.0
    %751 = vmatprep.subr.mxu0 0.0
    %752 = vmatpush1.xpose.msra.mxu0 0.0
    %753 = vmatprep.subr.mxu0 0.0
    %754 = vmatpush1.xpose.msra.mxu0 0.0
    %755 = vmatprep.subr.mxu0 0.0
    %756 = vmatpush1.xpose.msra.mxu0 0.0
    %757 = vmatprep.subr.mxu0 0.0
    %758 = vmatpush1.xpose.msra.mxu0 0.0
    %759 = vmatprep.subr.mxu0 0.0
    %760 = vmatpush1.xpose.msra.mxu0 0.0
    %761 = vmatprep.subr.mxu0 0.0
    %762 = vmatpush1.xpose.msra.mxu0 0.0
    %763 = vmatprep.subr.mxu0 0.0
    %764 = vmatpush1.xpose.msra.mxu0 0.0
    %765 = vmatprep.subr.mxu0 0.0
    %766 = vmatpush1.xpose.msra.mxu0 0.0
    %767 = vmatprep.subr.mxu0 0.0
    %768 = vmatpush1.xpose.msra.mxu0 0.0
    %769 = vmatprep.subr.mxu0 0.0
    %770 = vmatpush1.xpose.msra.mxu0 0.0
    %771 = vmatprep.subr.mxu0 0.0
    %772 = vmatpush1.xpose.msra.mxu0 0.0
    %773 = vmatprep.subr.mxu0 0.0
    %774 = vmatpush1.xpose.msra.mxu0 0.0
    %775 = vmatprep.subr.mxu0 0.0
    %776 = vmatpush1.xpose.msra.mxu0 %v743
    %777 = vmatprep.subr.mxu0 0.0
    %778 = vmatpush2.xpose.msra.mxu0 0.0
    %779 = vmatprep.subr.mxu0 0.0
    %780 = vmatpush2.xpose.msra.mxu0 0.0
    %781 = vmatprep.subr.mxu0 0.0
    %782 = vmatpush2.xpose.msra.mxu0 0.0
    %783 = vmatprep.subr.mxu0 0.0
    %784 = vmatpush2.xpose.msra.mxu0 0.0
    %785 = vmatprep.subr.mxu0 0.0
    %786 = vmatpush2.xpose.msra.mxu0 0.0
    %787 = vmatprep.subr.mxu0 0.0
    %788 = vmatpush2.xpose.msra.mxu0 0.0
    %789 = vmatprep.subr.mxu0 0.0
    %790 = vmatpush2.xpose.msra.mxu0 0.0
    %791 = vmatprep.subr.mxu0 0.0
    %792 = vmatpush2.xpose.msra.mxu0 0.0
    %793 = vmatprep.subr.mxu0 0.0
    %794 = vmatpush2.xpose.msra.mxu0 0.0
    %795 = vmatprep.subr.mxu0 0.0
    %796 = vmatpush2.xpose.msra.mxu0 0.0
    %797 = vmatprep.subr.mxu0 0.0
    %798 = vmatpush2.xpose.msra.mxu0 0.0
    %799 = vmatprep.subr.mxu0 0.0
    %800 = vmatpush2.xpose.msra.mxu0 0.0
    %801 = vmatprep.subr.mxu0 0.0
    %802 = vmatpush2.xpose.msra.mxu0 0.0
    %803 = vmatprep.subr.mxu0 0.0
    %804 = vmatpush2.xpose.msra.mxu0 0.0
    %805 = vmatprep.subr.mxu0 0.0
    %806 = vmatpush2.xpose.msra.mxu0 0.0
    %807 = vmatprep.subr.mxu0 0.0
    %808 = vmatpush2.xpose.msra.mxu0 0.0
    %809 = vmatprep.mubr.f32.mxu0 0.0
    %810 = vmatmul.mubr.f32.gmra.mxu0 %v741
    %v811 = vpop.f32.mrf.mxu0
    %v812 = vadd.f32 0.0, %v811
    %v813 = vpop.f32.mrf.mxu0
    %814 = vdwg.mxu0
    %v815 = vmul.f32 %v812, 0.35355338
    %v816 = vsel %vm143, %v815, -inf
    %817 = vmax.xlane.f32.xlu0 %v816
    %v818 = vpop.xlane.xlu0 %817
    %v819 = vsub.f32 %v815, %v818
    %v820 = vmul.f32 %v819, 1.442695
    %v821 = vpow.pop %v820
    %v822 = vsel %vm143, %v821, 0.0
    %823 = vadd.xlane.f32.xlu0 %v822
    %v824 = vpop.xlane.xlu0 %823
    %v825 = vrcp.pop %v824
    %v826 = vmul.f32 %v821, %v825
    %827 = vrot.lane.b32.xlu0 %v132, 40
    %v828 = vpop.permute.xlu0 %827
    %v831 = vsel %vm143, %v826, 0
    %833 = vmatprep.subr.mxu0 0.0
    %834 = vmatpush1.msra.mxu0 0.0
    %835 = vmatprep.subr.mxu0 0.0
    %836 = vmatpush1.msra.mxu0 0.0
    %837 = vmatprep.subr.mxu0 0.0
    %838 = vmatpush1.msra.mxu0 0.0
    %839 = vmatprep.subr.mxu0 0.0
    %840 = vmatpush1.msra.mxu0 0.0
    %841 = vmatprep.subr.mxu0 0.0
    %842 = vmatpush1.msra.mxu0 0.0
    %843 = vmatprep.subr.mxu0 0.0
    %844 = vmatpush1.msra.mxu0 0.0
    %845 = vmatprep.subr.mxu0 0.0
    %846 = vmatpush1.msra.mxu0 0.0
    %847 = vmatprep.subr.mxu0 0.0
    %848 = vmatpush1.msra.mxu0 0.0
    %849 = vmatprep.subr.mxu0 0.0
    %850 = vmatpush1.msra.mxu0 0.0
    %851 = vmatprep.subr.mxu0 0.0
    %852 = vmatpush1.msra.mxu0 0.0
    %853 = vmatprep.subr.mxu0 0.0
    %854 = vmatpush1.msra.mxu0 0.0
    %855 = vmatprep.subr.mxu0 0.0
    %856 = vmatpush1.msra.mxu0 0.0
    %857 = vmatprep.subr.mxu0 0.0
    %858 = vmatpush1.msra.mxu0 0.0
    %859 = vmatprep.subr.mxu0 0.0
    %860 = vmatpush1.msra.mxu0 0.0
    %861 = vmatprep.subr.mxu0 0.0
    %862 = vmatpush1.msra.mxu0 0.0
    %863 = vmatprep.subr.mxu0 0.0
    %864 = vmatpush1.msra.mxu0 %v828
    %865 = vmatprep.subr.mxu0 0.0
    %866 = vmatpush2.msra.mxu0 0.0
    %867 = vmatprep.subr.mxu0 0.0
    %868 = vmatpush2.msra.mxu0 0.0
    %869 = vmatprep.subr.mxu0 0.0
    %870 = vmatpush2.msra.mxu0 0.0
    %871 = vmatprep.subr.mxu0 0.0
    %872 = vmatpush2.msra.mxu0 0.0
    %873 = vmatprep.subr.mxu0 0.0
    %874 = vmatpush2.msra.mxu0 0.0
    %875 = vmatprep.subr.mxu0 0.0
    %876 = vmatpush2.msra.mxu0 0.0
    %877 = vmatprep.subr.mxu0 0.0
    %878 = vmatpush2.msra.mxu0 0.0
    %879 = vmatprep.subr.mxu0 0.0
    %880 = vmatpush2.msra.mxu0 0.0
    %881 = vmatprep.subr.mxu0 0.0
    %882 = vmatpush2.msra.mxu0 0.0
    %883 = vmatprep.subr.mxu0 0.0
    %884 = vmatpush2.msra.mxu0 0.0
    %885 = vmatprep.subr.mxu0 0.0
    %886 = vmatpush2.msra.mxu0 0.0
    %887 = vmatprep.subr.mxu0 0.0
    %888 = vmatpush2.msra.mxu0 0.0
    %889 = vmatprep.subr.mxu0 0.0
    %890 = vmatpush2.msra.mxu0 0.0
    %891 = vmatprep.subr.mxu0 0.0
    %892 = vmatpush2.msra.mxu0 0.0
    %893 = vmatprep.subr.mxu0 0.0
    %894 = vmatpush2.msra.mxu0 0.0
    %895 = vmatprep.subr.mxu0 0.0
    %896 = vmatpush2.msra.mxu0 0.0
    %897 = vmatprep.mubr.f32.mxu0 0.0
    %898 = vmatmul.mubr.f32.gmra.mxu0 %v831
    %v899 = vpop.f32.mrf.mxu0
    %v900 = vadd.f32 0.0, %v899
    %v901 = vpop.f32.mrf.mxu0
    %902 = vdwg.mxu0
    %903 = vxpose.xlu0.b32.start [1/16] %v900, 128
    %904 = vxpose.xlu0.b32.cont [2/16] 0.0, 128
    %905 = vxpose.xlu0.b32.cont [3/16] 0.0, 128
    %906 = vxpose.xlu0.b32.cont [4/16] 0.0, 128
    %907 = vxpose.xlu0.b32.cont [5/16] 0.0, 128
    %908 = vxpose.xlu0.b32.cont [6/16] 0.0, 128
    %909 = vxpose.xlu0.b32.cont [7/16] 0.0, 128
    %910 = vxpose.xlu0.b32.cont [8/16] 0.0, 128
    %911 = vxpose.xlu0.b32.cont [9/16] 0.0, 128
    %912 = vxpose.xlu0.b32.cont [10/16] 0.0, 128
    %913 = vxpose.xlu0.b32.cont [11/16] 0.0, 128
    %914 = vxpose.xlu0.b32.cont [12/16] 0.0, 128
    %915 = vxpose.xlu0.b32.cont [13/16] 0.0, 128
    %916 = vxpose.xlu0.b32.cont [14/16] 0.0, 128
    %917 = vxpose.xlu0.b32.cont [15/16] 0.0, 128
    %918 = vxpose.xlu0.b32.end [16/16] 0.0, 128
    %v919 = vpop.trf.xlu0
    %v920 = vpop.trf.xlu0
    %v921 = vpop.trf.xlu0
    %v922 = vpop.trf.xlu0
    %v923 = vpop.trf.xlu0
    %v924 = vpop.trf.xlu0
    %v925 = vpop.trf.xlu0
    %v926 = vpop.trf.xlu0
    %v927 = vpop.trf.xlu0
    %v928 = vpop.trf.xlu0
    %v929 = vpop.trf.xlu0
    %v930 = vpop.trf.xlu0
    %v931 = vpop.trf.xlu0
    %v932 = vpop.trf.xlu0
    %v933 = vpop.trf.xlu0
    %v934 = vpop.trf.xlu0
    %935 = vst.msk [vmem:[#allocation2 + $0x18] sm:$0xff] %vm143, %v919
    %937 = vrot.lane.b32.xlu0 %v137, 96
    %v938 = vpop.permute.xlu0 %937
    %v939 = vsel %vm143, %v137, 0
    %v941 = vsel %vm143, %v938, 0
    %943 = vmatprep.subr.mxu0 0.0
    %944 = vmatpush1.xpose.msra.mxu0 0.0
    %945 = vmatprep.subr.mxu0 0.0
    %946 = vmatpush1.xpose.msra.mxu0 0.0
    %947 = vmatprep.subr.mxu0 0.0
    %948 = vmatpush1.xpose.msra.mxu0 0.0
    %949 = vmatprep.subr.mxu0 0.0
    %950 = vmatpush1.xpose.msra.mxu0 0.0
    %951 = vmatprep.subr.mxu0 0.0
    %952 = vmatpush1.xpose.msra.mxu0 0.0
    %953 = vmatprep.subr.mxu0 0.0
    %954 = vmatpush1.xpose.msra.mxu0 0.0
    %955 = vmatprep.subr.mxu0 0.0
    %956 = vmatpush1.xpose.msra.mxu0 0.0
    %957 = vmatprep.subr.mxu0 0.0
    %958 = vmatpush1.xpose.msra.mxu0 0.0
    %959 = vmatprep.subr.mxu0 0.0
    %960 = vmatpush1.xpose.msra.mxu0 0.0
    %961 = vmatprep.subr.mxu0 0.0
    %962 = vmatpush1.xpose.msra.mxu0 0.0
    %963 = vmatprep.subr.mxu0 0.0
    %964 = vmatpush1.xpose.msra.mxu0 0.0
    %965 = vmatprep.subr.mxu0 0.0
    %966 = vmatpush1.xpose.msra.mxu0 0.0
    %967 = vmatprep.subr.mxu0 0.0
    %968 = vmatpush1.xpose.msra.mxu0 0.0
    %969 = vmatprep.subr.mxu0 0.0
    %970 = vmatpush1.xpose.msra.mxu0 0.0
    %971 = vmatprep.subr.mxu0 0.0
    %972 = vmatpush1.xpose.msra.mxu0 0.0
    %973 = vmatprep.subr.mxu0 0.0
    %974 = vmatpush1.xpose.msra.mxu0 %v941
    %975 = vmatprep.subr.mxu0 0.0
    %976 = vmatpush2.xpose.msra.mxu0 0.0
    %977 = vmatprep.subr.mxu0 0.0
    %978 = vmatpush2.xpose.msra.mxu0 0.0
    %979 = vmatprep.subr.mxu0 0.0
    %980 = vmatpush2.xpose.msra.mxu0 0.0
    %981 = vmatprep.subr.mxu0 0.0
    %982 = vmatpush2.xpose.msra.mxu0 0.0
    %983 = vmatprep.subr.mxu0 0.0
    %984 = vmatpush2.xpose.msra.mxu0 0.0
    %985 = vmatprep.subr.mxu0 0.0
    %986 = vmatpush2.xpose.msra.mxu0 0.0
    %987 = vmatprep.subr.mxu0 0.0
    %988 = vmatpush2.xpose.msra.mxu0 0.0
    %989 = vmatprep.subr.mxu0 0.0
    %990 = vmatpush2.xpose.msra.mxu0 0.0
    %991 = vmatprep.subr.mxu0 0.0
    %992 = vmatpush2.xpose.msra.mxu0 0.0
    %993 = vmatprep.subr.mxu0 0.0
    %994 = vmatpush2.xpose.msra.mxu0 0.0
    %995 = vmatprep.subr.mxu0 0.0
    %996 = vmatpush2.xpose.msra.mxu0 0.0
    %997 = vmatprep.subr.mxu0 0.0
    %998 = vmatpush2.xpose.msra.mxu0 0.0
    %999 = vmatprep.subr.mxu0 0.0
    %1000 = vmatpush2.xpose.msra.mxu0 0.0
    %1001 = vmatprep.subr.mxu0 0.0
    %1002 = vmatpush2.xpose.msra.mxu0 0.0
    %1003 = vmatprep.subr.mxu0 0.0
    %1004 = vmatpush2.xpose.msra.mxu0 0.0
    %1005 = vmatprep.subr.mxu0 0.0
    %1006 = vmatpush2.xpose.msra.mxu0 0.0
    %1007 = vmatprep.mubr.f32.mxu0 0.0
    %1008 = vmatmul.mubr.f32.gmra.mxu0 %v939
    %v1009 = vpop.f32.mrf.mxu0
    %v1010 = vadd.f32 0.0, %v1009
    %v1011 = vpop.f32.mrf.mxu0
    %1012 = vdwg.mxu0
    %v1013 = vmul.f32 %v1010, 0.35355338
    %v1014 = vsel %vm143, %v1013, -inf
    %1015 = vmax.xlane.f32.xlu0 %v1014
    %v1016 = vpop.xlane.xlu0 %1015
    %v1017 = vsub.f32 %v1013, %v1016
    %v1018 = vmul.f32 %v1017, 1.442695
    %v1019 = vpow.pop %v1018
    %v1020 = vsel %vm143, %v1019, 0.0
    %1021 = vadd.xlane.f32.xlu0 %v1020
    %v1022 = vpop.xlane.xlu0 %1021
    %v1023 = vrcp.pop %v1022
    %v1024 = vmul.f32 %v1019, %v1023
    %1025 = vrot.lane.b32.xlu0 %v137, 64
    %v1026 = vpop.permute.xlu0 %1025
    %v1029 = vsel %vm143, %v1024, 0
    %1031 = vmatprep.subr.mxu0 0.0
    %1032 = vmatpush1.msra.mxu0 0.0
    %1033 = vmatprep.subr.mxu0 0.0
    %1034 = vmatpush1.msra.mxu0 0.0
    %1035 = vmatprep.subr.mxu0 0.0
    %1036 = vmatpush1.msra.mxu0 0.0
    %1037 = vmatprep.subr.mxu0 0.0
    %1038 = vmatpush1.msra.mxu0 0.0
    %1039 = vmatprep.subr.mxu0 0.0
    %1040 = vmatpush1.msra.mxu0 0.0
    %1041 = vmatprep.subr.mxu0 0.0
    %1042 = vmatpush1.msra.mxu0 0.0
    %1043 = vmatprep.subr.mxu0 0.0
    %1044 = vmatpush1.msra.mxu0 0.0
    %1045 = vmatprep.subr.mxu0 0.0
    %1046 = vmatpush1.msra.mxu0 0.0
    %1047 = vmatprep.subr.mxu0 0.0
    %1048 = vmatpush1.msra.mxu0 0.0
    %1049 = vmatprep.subr.mxu0 0.0
    %1050 = vmatpush1.msra.mxu0 0.0
    %1051 = vmatprep.subr.mxu0 0.0
    %1052 = vmatpush1.msra.mxu0 0.0
    %1053 = vmatprep.subr.mxu0 0.0
    %1054 = vmatpush1.msra.mxu0 0.0
    %1055 = vmatprep.subr.mxu0 0.0
    %1056 = vmatpush1.msra.mxu0 0.0
    %1057 = vmatprep.subr.mxu0 0.0
    %1058 = vmatpush1.msra.mxu0 0.0
    %1059 = vmatprep.subr.mxu0 0.0
    %1060 = vmatpush1.msra.mxu0 0.0
    %1061 = vmatprep.subr.mxu0 0.0
    %1062 = vmatpush1.msra.mxu0 %v1026
    %1063 = vmatprep.subr.mxu0 0.0
    %1064 = vmatpush2.msra.mxu0 0.0
    %1065 = vmatprep.subr.mxu0 0.0
    %1066 = vmatpush2.msra.mxu0 0.0
    %1067 = vmatprep.subr.mxu0 0.0
    %1068 = vmatpush2.msra.mxu0 0.0
    %1069 = vmatprep.subr.mxu0 0.0
    %1070 = vmatpush2.msra.mxu0 0.0
    %1071 = vmatprep.subr.mxu0 0.0
    %1072 = vmatpush2.msra.mxu0 0.0
    %1073 = vmatprep.subr.mxu0 0.0
    %1074 = vmatpush2.msra.mxu0 0.0
    %1075 = vmatprep.subr.mxu0 0.0
    %1076 = vmatpush2.msra.mxu0 0.0
    %1077 = vmatprep.subr.mxu0 0.0
    %1078 = vmatpush2.msra.mxu0 0.0
    %1079 = vmatprep.subr.mxu0 0.0
    %1080 = vmatpush2.msra.mxu0 0.0
    %1081 = vmatprep.subr.mxu0 0.0
    %1082 = vmatpush2.msra.mxu0 0.0
    %1083 = vmatprep.subr.mxu0 0.0
    %1084 = vmatpush2.msra.mxu0 0.0
    %1085 = vmatprep.subr.mxu0 0.0
    %1086 = vmatpush2.msra.mxu0 0.0
    %1087 = vmatprep.subr.mxu0 0.0
    %1088 = vmatpush2.msra.mxu0 0.0
    %1089 = vmatprep.subr.mxu0 0.0
    %1090 = vmatpush2.msra.mxu0 0.0
    %1091 = vmatprep.subr.mxu0 0.0
    %1092 = vmatpush2.msra.mxu0 0.0
    %1093 = vmatprep.subr.mxu0 0.0
    %1094 = vmatpush2.msra.mxu0 0.0
    %1095 = vmatprep.mubr.f32.mxu0 0.0
    %1096 = vmatmul.mubr.f32.gmra.mxu0 %v1029
    %v1097 = vpop.f32.mrf.mxu0
    %v1098 = vadd.f32 0.0, %v1097
    %v1099 = vpop.f32.mrf.mxu0
    %1100 = vdwg.mxu0
    %1101 = vxpose.xlu0.b32.start [1/16] %v1098, 128
    %1102 = vxpose.xlu0.b32.cont [2/16] 0.0, 128
    %1103 = vxpose.xlu0.b32.cont [3/16] 0.0, 128
    %1104 = vxpose.xlu0.b32.cont [4/16] 0.0, 128
    %1105 = vxpose.xlu0.b32.cont [5/16] 0.0, 128
    %1106 = vxpose.xlu0.b32.cont [6/16] 0.0, 128
    %1107 = vxpose.xlu0.b32.cont [7/16] 0.0, 128
    %1108 = vxpose.xlu0.b32.cont [8/16] 0.0, 128
    %1109 = vxpose.xlu0.b32.cont [9/16] 0.0, 128
    %1110 = vxpose.xlu0.b32.cont [10/16] 0.0, 128
    %1111 = vxpose.xlu0.b32.cont [11/16] 0.0, 128
    %1112 = vxpose.xlu0.b32.cont [12/16] 0.0, 128
    %1113 = vxpose.xlu0.b32.cont [13/16] 0.0, 128
    %1114 = vxpose.xlu0.b32.cont [14/16] 0.0, 128
    %1115 = vxpose.xlu0.b32.cont [15/16] 0.0, 128
    %1116 = vxpose.xlu0.b32.end [16/16] 0.0, 128
    %v1117 = vpop.trf.xlu0
    %v1118 = vpop.trf.xlu0
    %v1119 = vpop.trf.xlu0
    %v1120 = vpop.trf.xlu0
    %v1121 = vpop.trf.xlu0
    %v1122 = vpop.trf.xlu0
    %v1123 = vpop.trf.xlu0
    %v1124 = vpop.trf.xlu0
    %v1125 = vpop.trf.xlu0
    %v1126 = vpop.trf.xlu0
    %v1127 = vpop.trf.xlu0
    %v1128 = vpop.trf.xlu0
    %v1129 = vpop.trf.xlu0
    %v1130 = vpop.trf.xlu0
    %v1131 = vpop.trf.xlu0
    %v1132 = vpop.trf.xlu0
    %1133 = vst.msk [vmem:[#allocation2 + $0x20] sm:$0xff] %vm143, %v1117
    %1134 = vrot.lane.b32.xlu0 %v137, 120
    %v1135 = vpop.permute.xlu0 %1134
    %1136 = vrot.lane.b32.xlu0 %v137, 88
    %v1137 = vpop.permute.xlu0 %1136
    %v1138 = vsel %vm143, %v1135, 0
    %v1140 = vsel %vm143, %v1137, 0
    %1142 = vmatprep.subr.mxu0 0.0
    %1143 = vmatpush1.xpose.msra.mxu0 0.0
    %1144 = vmatprep.subr.mxu0 0.0
    %1145 = vmatpush1.xpose.msra.mxu0 0.0
    %1146 = vmatprep.subr.mxu0 0.0
    %1147 = vmatpush1.xpose.msra.mxu0 0.0
    %1148 = vmatprep.subr.mxu0 0.0
    %1149 = vmatpush1.xpose.msra.mxu0 0.0
    %1150 = vmatprep.subr.mxu0 0.0
    %1151 = vmatpush1.xpose.msra.mxu0 0.0
    %1152 = vmatprep.subr.mxu0 0.0
    %1153 = vmatpush1.xpose.msra.mxu0 0.0
    %1154 = vmatprep.subr.mxu0 0.0
    %1155 = vmatpush1.xpose.msra.mxu0 0.0
    %1156 = vmatprep.subr.mxu0 0.0
    %1157 = vmatpush1.xpose.msra.mxu0 0.0
    %1158 = vmatprep.subr.mxu0 0.0
    %1159 = vmatpush1.xpose.msra.mxu0 0.0
    %1160 = vmatprep.subr.mxu0 0.0
    %1161 = vmatpush1.xpose.msra.mxu0 0.0
    %1162 = vmatprep.subr.mxu0 0.0
    %1163 = vmatpush1.xpose.msra.mxu0 0.0
    %1164 = vmatprep.subr.mxu0 0.0
    %1165 = vmatpush1.xpose.msra.mxu0 0.0
    %1166 = vmatprep.subr.mxu0 0.0
    %1167 = vmatpush1.xpose.msra.mxu0 0.0
    %1168 = vmatprep.subr.mxu0 0.0
    %1169 = vmatpush1.xpose.msra.mxu0 0.0
    %1170 = vmatprep.subr.mxu0 0.0
    %1171 = vmatpush1.xpose.msra.mxu0 0.0
    %1172 = vmatprep.subr.mxu0 0.0
    %1173 = vmatpush1.xpose.msra.mxu0 %v1140
    %1174 = vmatprep.subr.mxu0 0.0
    %1175 = vmatpush2.xpose.msra.mxu0 0.0
    %1176 = vmatprep.subr.mxu0 0.0
    %1177 = vmatpush2.xpose.msra.mxu0 0.0
    %1178 = vmatprep.subr.mxu0 0.0
    %1179 = vmatpush2.xpose.msra.mxu0 0.0
    %1180 = vmatprep.subr.mxu0 0.0
    %1181 = vmatpush2.xpose.msra.mxu0 0.0
    %1182 = vmatprep.subr.mxu0 0.0
    %1183 = vmatpush2.xpose.msra.mxu0 0.0
    %1184 = vmatprep.subr.mxu0 0.0
    %1185 = vmatpush2.xpose.msra.mxu0 0.0
    %1186 = vmatprep.subr.mxu0 0.0
    %1187 = vmatpush2.xpose.msra.mxu0 0.0
    %1188 = vmatprep.subr.mxu0 0.0
    %1189 = vmatpush2.xpose.msra.mxu0 0.0
    %1190 = vmatprep.subr.mxu0 0.0
    %1191 = vmatpush2.xpose.msra.mxu0 0.0
    %1192 = vmatprep.subr.mxu0 0.0
    %1193 = vmatpush2.xpose.msra.mxu0 0.0
    %1194 = vmatprep.subr.mxu0 0.0
    %1195 = vmatpush2.xpose.msra.mxu0 0.0
    %1196 = vmatprep.subr.mxu0 0.0
    %1197 = vmatpush2.xpose.msra.mxu0 0.0
    %1198 = vmatprep.subr.mxu0 0.0
    %1199 = vmatpush2.xpose.msra.mxu0 0.0
    %1200 = vmatprep.subr.mxu0 0.0
    %1201 = vmatpush2.xpose.msra.mxu0 0.0
    %1202 = vmatprep.subr.mxu0 0.0
    %1203 = vmatpush2.xpose.msra.mxu0 0.0
    %1204 = vmatprep.subr.mxu0 0.0
    %1205 = vmatpush2.xpose.msra.mxu0 0.0
    %1206 = vmatprep.mubr.f32.mxu0 0.0
    %1207 = vmatmul.mubr.f32.gmra.mxu0 %v1138
    %v1208 = vpop.f32.mrf.mxu0
    %v1209 = vadd.f32 0.0, %v1208
    %v1210 = vpop.f32.mrf.mxu0
    %1211 = vdwg.mxu0
    %v1212 = vmul.f32 %v1209, 0.35355338
    %v1213 = vsel %vm143, %v1212, -inf
    %1214 = vmax.xlane.f32.xlu0 %v1213
    %v1215 = vpop.xlane.xlu0 %1214
    %v1216 = vsub.f32 %v1212, %v1215
    %v1217 = vmul.f32 %v1216, 1.442695
    %v1218 = vpow.pop %v1217
    %v1219 = vsel %vm143, %v1218, 0.0
    %1220 = vadd.xlane.f32.xlu0 %v1219
    %v1221 = vpop.xlane.xlu0 %1220
    %v1222 = vrcp.pop %v1221
    %v1223 = vmul.f32 %v1218, %v1222
    %1224 = vrot.lane.b32.xlu0 %v137, 56
    %v1225 = vpop.permute.xlu0 %1224
    %v1228 = vsel %vm143, %v1223, 0
    %1230 = vmatprep.subr.mxu0 0.0
    %1231 = vmatpush1.msra.mxu0 0.0
    %1232 = vmatprep.subr.mxu0 0.0
    %1233 = vmatpush1.msra.mxu0 0.0
    %1234 = vmatprep.subr.mxu0 0.0
    %1235 = vmatpush1.msra.mxu0 0.0
    %1236 = vmatprep.subr.mxu0 0.0
    %1237 = vmatpush1.msra.mxu0 0.0
    %1238 = vmatprep.subr.mxu0 0.0
    %1239 = vmatpush1.msra.mxu0 0.0
    %1240 = vmatprep.subr.mxu0 0.0
    %1241 = vmatpush1.msra.mxu0 0.0
    %1242 = vmatprep.subr.mxu0 0.0
    %1243 = vmatpush1.msra.mxu0 0.0
    %1244 = vmatprep.subr.mxu0 0.0
    %1245 = vmatpush1.msra.mxu0 0.0
    %1246 = vmatprep.subr.mxu0 0.0
    %1247 = vmatpush1.msra.mxu0 0.0
    %1248 = vmatprep.subr.mxu0 0.0
    %1249 = vmatpush1.msra.mxu0 0.0
    %1250 = vmatprep.subr.mxu0 0.0
    %1251 = vmatpush1.msra.mxu0 0.0
    %1252 = vmatprep.subr.mxu0 0.0
    %1253 = vmatpush1.msra.mxu0 0.0
    %1254 = vmatprep.subr.mxu0 0.0
    %1255 = vmatpush1.msra.mxu0 0.0
    %1256 = vmatprep.subr.mxu0 0.0
    %1257 = vmatpush1.msra.mxu0 0.0
    %1258 = vmatprep.subr.mxu0 0.0
    %1259 = vmatpush1.msra.mxu0 0.0
    %1260 = vmatprep.subr.mxu0 0.0
    %1261 = vmatpush1.msra.mxu0 %v1225
    %1262 = vmatprep.subr.mxu0 0.0
    %1263 = vmatpush2.msra.mxu0 0.0
    %1264 = vmatprep.subr.mxu0 0.0
    %1265 = vmatpush2.msra.mxu0 0.0
    %1266 = vmatprep.subr.mxu0 0.0
    %1267 = vmatpush2.msra.mxu0 0.0
    %1268 = vmatprep.subr.mxu0 0.0
    %1269 = vmatpush2.msra.mxu0 0.0
    %1270 = vmatprep.subr.mxu0 0.0
    %1271 = vmatpush2.msra.mxu0 0.0
    %1272 = vmatprep.subr.mxu0 0.0
    %1273 = vmatpush2.msra.mxu0 0.0
    %1274 = vmatprep.subr.mxu0 0.0
    %1275 = vmatpush2.msra.mxu0 0.0
    %1276 = vmatprep.subr.mxu0 0.0
    %1277 = vmatpush2.msra.mxu0 0.0
    %1278 = vmatprep.subr.mxu0 0.0
    %1279 = vmatpush2.msra.mxu0 0.0
    %1280 = vmatprep.subr.mxu0 0.0
    %1281 = vmatpush2.msra.mxu0 0.0
    %1282 = vmatprep.subr.mxu0 0.0
    %1283 = vmatpush2.msra.mxu0 0.0
    %1284 = vmatprep.subr.mxu0 0.0
    %1285 = vmatpush2.msra.mxu0 0.0
    %1286 = vmatprep.subr.mxu0 0.0
    %1287 = vmatpush2.msra.mxu0 0.0
    %1288 = vmatprep.subr.mxu0 0.0
    %1289 = vmatpush2.msra.mxu0 0.0
    %1290 = vmatprep.subr.mxu0 0.0
    %1291 = vmatpush2.msra.mxu0 0.0
    %1292 = vmatprep.subr.mxu0 0.0
    %1293 = vmatpush2.msra.mxu0 0.0
    %1294 = vmatprep.mubr.f32.mxu0 0.0
    %1295 = vmatmul.mubr.f32.gmra.mxu0 %v1228
    %v1296 = vpop.f32.mrf.mxu0
    %v1297 = vadd.f32 0.0, %v1296
    %v1298 = vpop.f32.mrf.mxu0
    %1299 = vdwg.mxu0
    %1300 = vxpose.xlu0.b32.start [1/16] %v1297, 128
    %1301 = vxpose.xlu0.b32.cont [2/16] 0.0, 128
    %1302 = vxpose.xlu0.b32.cont [3/16] 0.0, 128
    %1303 = vxpose.xlu0.b32.cont [4/16] 0.0, 128
    %1304 = vxpose.xlu0.b32.cont [5/16] 0.0, 128
    %1305 = vxpose.xlu0.b32.cont [6/16] 0.0, 128
    %1306 = vxpose.xlu0.b32.cont [7/16] 0.0, 128
    %1307 = vxpose.xlu0.b32.cont [8/16] 0.0, 128
    %1308 = vxpose.xlu0.b32.cont [9/16] 0.0, 128
    %1309 = vxpose.xlu0.b32.cont [10/16] 0.0, 128
    %1310 = vxpose.xlu0.b32.cont [11/16] 0.0, 128
    %1311 = vxpose.xlu0.b32.cont [12/16] 0.0, 128
    %1312 = vxpose.xlu0.b32.cont [13/16] 0.0, 128
    %1313 = vxpose.xlu0.b32.cont [14/16] 0.0, 128
    %1314 = vxpose.xlu0.b32.cont [15/16] 0.0, 128
    %1315 = vxpose.xlu0.b32.end [16/16] 0.0, 128
    %v1316 = vpop.trf.xlu0
    %v1317 = vpop.trf.xlu0
    %v1318 = vpop.trf.xlu0
    %v1319 = vpop.trf.xlu0
    %v1320 = vpop.trf.xlu0
    %v1321 = vpop.trf.xlu0
    %v1322 = vpop.trf.xlu0
    %v1323 = vpop.trf.xlu0
    %v1324 = vpop.trf.xlu0
    %v1325 = vpop.trf.xlu0
    %v1326 = vpop.trf.xlu0
    %v1327 = vpop.trf.xlu0
    %v1328 = vpop.trf.xlu0
    %v1329 = vpop.trf.xlu0
    %v1330 = vpop.trf.xlu0
    %v1331 = vpop.trf.xlu0
    %1332 = vst.msk [vmem:[#allocation2 + $0x28] sm:$0xff] %vm143, %v1316
    %1333 = vrot.lane.b32.xlu0 %v137, 112
    %v1334 = vpop.permute.xlu0 %1333
    %1335 = vrot.lane.b32.xlu0 %v137, 80
    %v1336 = vpop.permute.xlu0 %1335
    %v1337 = vsel %vm143, %v1334, 0
    %v1339 = vsel %vm143, %v1336, 0
    %1341 = vmatprep.subr.mxu0 0.0
    %1342 = vmatpush1.xpose.msra.mxu0 0.0
    %1343 = vmatprep.subr.mxu0 0.0
    %1344 = vmatpush1.xpose.msra.mxu0 0.0
    %1345 = vmatprep.subr.mxu0 0.0
    %1346 = vmatpush1.xpose.msra.mxu0 0.0
    %1347 = vmatprep.subr.mxu0 0.0
    %1348 = vmatpush1.xpose.msra.mxu0 0.0
    %1349 = vmatprep.subr.mxu0 0.0
    %1350 = vmatpush1.xpose.msra.mxu0 0.0
    %1351 = vmatprep.subr.mxu0 0.0
    %1352 = vmatpush1.xpose.msra.mxu0 0.0
    %1353 = vmatprep.subr.mxu0 0.0
    %1354 = vmatpush1.xpose.msra.mxu0 0.0
    %1355 = vmatprep.subr.mxu0 0.0
    %1356 = vmatpush1.xpose.msra.mxu0 0.0
    %1357 = vmatprep.subr.mxu0 0.0
    %1358 = vmatpush1.xpose.msra.mxu0 0.0
    %1359 = vmatprep.subr.mxu0 0.0
    %1360 = vmatpush1.xpose.msra.mxu0 0.0
    %1361 = vmatprep.subr.mxu0 0.0
    %1362 = vmatpush1.xpose.msra.mxu0 0.0
    %1363 = vmatprep.subr.mxu0 0.0
    %1364 = vmatpush1.xpose.msra.mxu0 0.0
    %1365 = vmatprep.subr.mxu0 0.0
    %1366 = vmatpush1.xpose.msra.mxu0 0.0
    %1367 = vmatprep.subr.mxu0 0.0
    %1368 = vmatpush1.xpose.msra.mxu0 0.0
    %1369 = vmatprep.subr.mxu0 0.0
    %1370 = vmatpush1.xpose.msra.mxu0 0.0
    %1371 = vmatprep.subr.mxu0 0.0
    %1372 = vmatpush1.xpose.msra.mxu0 %v1339
    %1373 = vmatprep.subr.mxu0 0.0
    %1374 = vmatpush2.xpose.msra.mxu0 0.0
    %1375 = vmatprep.subr.mxu0 0.0
    %1376 = vmatpush2.xpose.msra.mxu0 0.0
    %1377 = vmatprep.subr.mxu0 0.0
    %1378 = vmatpush2.xpose.msra.mxu0 0.0
    %1379 = vmatprep.subr.mxu0 0.0
    %1380 = vmatpush2.xpose.msra.mxu0 0.0
    %1381 = vmatprep.subr.mxu0 0.0
    %1382 = vmatpush2.xpose.msra.mxu0 0.0
    %1383 = vmatprep.subr.mxu0 0.0
    %1384 = vmatpush2.xpose.msra.mxu0 0.0
    %1385 = vmatprep.subr.mxu0 0.0
    %1386 = vmatpush2.xpose.msra.mxu0 0.0
    %1387 = vmatprep.subr.mxu0 0.0
    %1388 = vmatpush2.xpose.msra.mxu0 0.0
    %1389 = vmatprep.subr.mxu0 0.0
    %1390 = vmatpush2.xpose.msra.mxu0 0.0
    %1391 = vmatprep.subr.mxu0 0.0
    %1392 = vmatpush2.xpose.msra.mxu0 0.0
    %1393 = vmatprep.subr.mxu0 0.0
    %1394 = vmatpush2.xpose.msra.mxu0 0.0
    %1395 = vmatprep.subr.mxu0 0.0
    %1396 = vmatpush2.xpose.msra.mxu0 0.0
    %1397 = vmatprep.subr.mxu0 0.0
    %1398 = vmatpush2.xpose.msra.mxu0 0.0
    %1399 = vmatprep.subr.mxu0 0.0
    %1400 = vmatpush2.xpose.msra.mxu0 0.0
    %1401 = vmatprep.subr.mxu0 0.0
    %1402 = vmatpush2.xpose.msra.mxu0 0.0
    %1403 = vmatprep.subr.mxu0 0.0
    %1404 = vmatpush2.xpose.msra.mxu0 0.0
    %1405 = vmatprep.mubr.f32.mxu0 0.0
    %1406 = vmatmul.mubr.f32.gmra.mxu0 %v1337
    %v1407 = vpop.f32.mrf.mxu0
    %v1408 = vadd.f32 0.0, %v1407
    %v1409 = vpop.f32.mrf.mxu0
    %1410 = vdwg.mxu0
    %v1411 = vmul.f32 %v1408, 0.35355338
    %v1412 = vsel %vm143, %v1411, -inf
    %1413 = vmax.xlane.f32.xlu0 %v1412
    %v1414 = vpop.xlane.xlu0 %1413
    %v1415 = vsub.f32 %v1411, %v1414
    %v1416 = vmul.f32 %v1415, 1.442695
    %v1417 = vpow.pop %v1416
    %v1418 = vsel %vm143, %v1417, 0.0
    %1419 = vadd.xlane.f32.xlu0 %v1418
    %v1420 = vpop.xlane.xlu0 %1419
    %v1421 = vrcp.pop %v1420
    %v1422 = vmul.f32 %v1417, %v1421
    %1423 = vrot.lane.b32.xlu0 %v137, 48
    %v1424 = vpop.permute.xlu0 %1423
    %v1427 = vsel %vm143, %v1422, 0
    %1429 = vmatprep.subr.mxu0 0.0
    %1430 = vmatpush1.msra.mxu0 0.0
    %1431 = vmatprep.subr.mxu0 0.0
    %1432 = vmatpush1.msra.mxu0 0.0
    %1433 = vmatprep.subr.mxu0 0.0
    %1434 = vmatpush1.msra.mxu0 0.0
    %1435 = vmatprep.subr.mxu0 0.0
    %1436 = vmatpush1.msra.mxu0 0.0
    %1437 = vmatprep.subr.mxu0 0.0
    %1438 = vmatpush1.msra.mxu0 0.0
    %1439 = vmatprep.subr.mxu0 0.0
    %1440 = vmatpush1.msra.mxu0 0.0
    %1441 = vmatprep.subr.mxu0 0.0
    %1442 = vmatpush1.msra.mxu0 0.0
    %1443 = vmatprep.subr.mxu0 0.0
    %1444 = vmatpush1.msra.mxu0 0.0
    %1445 = vmatprep.subr.mxu0 0.0
    %1446 = vmatpush1.msra.mxu0 0.0
    %1447 = vmatprep.subr.mxu0 0.0
    %1448 = vmatpush1.msra.mxu0 0.0
    %1449 = vmatprep.subr.mxu0 0.0
    %1450 = vmatpush1.msra.mxu0 0.0
    %1451 = vmatprep.subr.mxu0 0.0
    %1452 = vmatpush1.msra.mxu0 0.0
    %1453 = vmatprep.subr.mxu0 0.0
    %1454 = vmatpush1.msra.mxu0 0.0
    %1455 = vmatprep.subr.mxu0 0.0
    %1456 = vmatpush1.msra.mxu0 0.0
    %1457 = vmatprep.subr.mxu0 0.0
    %1458 = vmatpush1.msra.mxu0 0.0
    %1459 = vmatprep.subr.mxu0 0.0
    %1460 = vmatpush1.msra.mxu0 %v1424
    %1461 = vmatprep.subr.mxu0 0.0
    %1462 = vmatpush2.msra.mxu0 0.0
    %1463 = vmatprep.subr.mxu0 0.0
    %1464 = vmatpush2.msra.mxu0 0.0
    %1465 = vmatprep.subr.mxu0 0.0
    %1466 = vmatpush2.msra.mxu0 0.0
    %1467 = vmatprep.subr.mxu0 0.0
    %1468 = vmatpush2.msra.mxu0 0.0
    %1469 = vmatprep.subr.mxu0 0.0
    %1470 = vmatpush2.msra.mxu0 0.0
    %1471 = vmatprep.subr.mxu0 0.0
    %1472 = vmatpush2.msra.mxu0 0.0
    %1473 = vmatprep.subr.mxu0 0.0
    %1474 = vmatpush2.msra.mxu0 0.0
    %1475 = vmatprep.subr.mxu0 0.0
    %1476 = vmatpush2.msra.mxu0 0.0
    %1477 = vmatprep.subr.mxu0 0.0
    %1478 = vmatpush2.msra.mxu0 0.0
    %1479 = vmatprep.subr.mxu0 0.0
    %1480 = vmatpush2.msra.mxu0 0.0
    %1481 = vmatprep.subr.mxu0 0.0
    %1482 = vmatpush2.msra.mxu0 0.0
    %1483 = vmatprep.subr.mxu0 0.0
    %1484 = vmatpush2.msra.mxu0 0.0
    %1485 = vmatprep.subr.mxu0 0.0
    %1486 = vmatpush2.msra.mxu0 0.0
    %1487 = vmatprep.subr.mxu0 0.0
    %1488 = vmatpush2.msra.mxu0 0.0
    %1489 = vmatprep.subr.mxu0 0.0
    %1490 = vmatpush2.msra.mxu0 0.0
    %1491 = vmatprep.subr.mxu0 0.0
    %1492 = vmatpush2.msra.mxu0 0.0
    %1493 = vmatprep.mubr.f32.mxu0 0.0
    %1494 = vmatmul.mubr.f32.gmra.mxu0 %v1427
    %v1495 = vpop.f32.mrf.mxu0
    %v1496 = vadd.f32 0.0, %v1495
    %v1497 = vpop.f32.mrf.mxu0
    %1498 = vdwg.mxu0
    %1499 = vxpose.xlu0.b32.start [1/16] %v1496, 128
    %1500 = vxpose.xlu0.b32.cont [2/16] 0.0, 128
    %1501 = vxpose.xlu0.b32.cont [3/16] 0.0, 128
    %1502 = vxpose.xlu0.b32.cont [4/16] 0.0, 128
    %1503 = vxpose.xlu0.b32.cont [5/16] 0.0, 128
    %1504 = vxpose.xlu0.b32.cont [6/16] 0.0, 128
    %1505 = vxpose.xlu0.b32.cont [7/16] 0.0, 128
    %1506 = vxpose.xlu0.b32.cont [8/16] 0.0, 128
    %1507 = vxpose.xlu0.b32.cont [9/16] 0.0, 128
    %1508 = vxpose.xlu0.b32.cont [10/16] 0.0, 128
    %1509 = vxpose.xlu0.b32.cont [11/16] 0.0, 128
    %1510 = vxpose.xlu0.b32.cont [12/16] 0.0, 128
    %1511 = vxpose.xlu0.b32.cont [13/16] 0.0, 128
    %1512 = vxpose.xlu0.b32.cont [14/16] 0.0, 128
    %1513 = vxpose.xlu0.b32.cont [15/16] 0.0, 128
    %1514 = vxpose.xlu0.b32.end [16/16] 0.0, 128
    %v1515 = vpop.trf.xlu0
    %v1516 = vpop.trf.xlu0
    %v1517 = vpop.trf.xlu0
    %v1518 = vpop.trf.xlu0
    %v1519 = vpop.trf.xlu0
    %v1520 = vpop.trf.xlu0
    %v1521 = vpop.trf.xlu0
    %v1522 = vpop.trf.xlu0
    %v1523 = vpop.trf.xlu0
    %v1524 = vpop.trf.xlu0
    %v1525 = vpop.trf.xlu0
    %v1526 = vpop.trf.xlu0
    %v1527 = vpop.trf.xlu0
    %v1528 = vpop.trf.xlu0
    %v1529 = vpop.trf.xlu0
    %v1530 = vpop.trf.xlu0
    %1531 = vst.msk [vmem:[#allocation2 + $0x30] sm:$0xff] %vm143, %v1515
    %1532 = vrot.lane.b32.xlu0 %v137, 104
    %v1533 = vpop.permute.xlu0 %1532
    %1534 = vrot.lane.b32.xlu0 %v137, 72
    %v1535 = vpop.permute.xlu0 %1534
    %v1536 = vsel %vm143, %v1533, 0
    %v1538 = vsel %vm143, %v1535, 0
    %1540 = vmatprep.subr.mxu0 0.0
    %1541 = vmatpush1.xpose.msra.mxu0 0.0
    %1542 = vmatprep.subr.mxu0 0.0
    %1543 = vmatpush1.xpose.msra.mxu0 0.0
    %1544 = vmatprep.subr.mxu0 0.0
    %1545 = vmatpush1.xpose.msra.mxu0 0.0
    %1546 = vmatprep.subr.mxu0 0.0
    %1547 = vmatpush1.xpose.msra.mxu0 0.0
    %1548 = vmatprep.subr.mxu0 0.0
    %1549 = vmatpush1.xpose.msra.mxu0 0.0
    %1550 = vmatprep.subr.mxu0 0.0
    %1551 = vmatpush1.xpose.msra.mxu0 0.0
    %1552 = vmatprep.subr.mxu0 0.0
    %1553 = vmatpush1.xpose.msra.mxu0 0.0
    %1554 = vmatprep.subr.mxu0 0.0
    %1555 = vmatpush1.xpose.msra.mxu0 0.0
    %1556 = vmatprep.subr.mxu0 0.0
    %1557 = vmatpush1.xpose.msra.mxu0 0.0
    %1558 = vmatprep.subr.mxu0 0.0
    %1559 = vmatpush1.xpose.msra.mxu0 0.0
    %1560 = vmatprep.subr.mxu0 0.0
    %1561 = vmatpush1.xpose.msra.mxu0 0.0
    %1562 = vmatprep.subr.mxu0 0.0
    %1563 = vmatpush1.xpose.msra.mxu0 0.0
    %1564 = vmatprep.subr.mxu0 0.0
    %1565 = vmatpush1.xpose.msra.mxu0 0.0
    %1566 = vmatprep.subr.mxu0 0.0
    %1567 = vmatpush1.xpose.msra.mxu0 0.0
    %1568 = vmatprep.subr.mxu0 0.0
    %1569 = vmatpush1.xpose.msra.mxu0 0.0
    %1570 = vmatprep.subr.mxu0 0.0
    %1571 = vmatpush1.xpose.msra.mxu0 %v1538
    %1572 = vmatprep.subr.mxu0 0.0
    %1573 = vmatpush2.xpose.msra.mxu0 0.0
    %1574 = vmatprep.subr.mxu0 0.0
    %1575 = vmatpush2.xpose.msra.mxu0 0.0
    %1576 = vmatprep.subr.mxu0 0.0
    %1577 = vmatpush2.xpose.msra.mxu0 0.0
    %1578 = vmatprep.subr.mxu0 0.0
    %1579 = vmatpush2.xpose.msra.mxu0 0.0
    %1580 = vmatprep.subr.mxu0 0.0
    %1581 = vmatpush2.xpose.msra.mxu0 0.0
    %1582 = vmatprep.subr.mxu0 0.0
    %1583 = vmatpush2.xpose.msra.mxu0 0.0
    %1584 = vmatprep.subr.mxu0 0.0
    %1585 = vmatpush2.xpose.msra.mxu0 0.0
    %1586 = vmatprep.subr.mxu0 0.0
    %1587 = vmatpush2.xpose.msra.mxu0 0.0
    %1588 = vmatprep.subr.mxu0 0.0
    %1589 = vmatpush2.xpose.msra.mxu0 0.0
    %1590 = vmatprep.subr.mxu0 0.0
    %1591 = vmatpush2.xpose.msra.mxu0 0.0
    %1592 = vmatprep.subr.mxu0 0.0
    %1593 = vmatpush2.xpose.msra.mxu0 0.0
    %1594 = vmatprep.subr.mxu0 0.0
    %1595 = vmatpush2.xpose.msra.mxu0 0.0
    %1596 = vmatprep.subr.mxu0 0.0
    %1597 = vmatpush2.xpose.msra.mxu0 0.0
    %1598 = vmatprep.subr.mxu0 0.0
    %1599 = vmatpush2.xpose.msra.mxu0 0.0
    %1600 = vmatprep.subr.mxu0 0.0
    %1601 = vmatpush2.xpose.msra.mxu0 0.0
    %1602 = vmatprep.subr.mxu0 0.0
    %1603 = vmatpush2.xpose.msra.mxu0 0.0
    %1604 = vmatprep.mubr.f32.mxu0 0.0
    %1605 = vmatmul.mubr.f32.gmra.mxu0 %v1536
    %v1606 = vpop.f32.mrf.mxu0
    %v1607 = vadd.f32 0.0, %v1606
    %v1608 = vpop.f32.mrf.mxu0
    %1609 = vdwg.mxu0
    %v1610 = vmul.f32 %v1607, 0.35355338
    %v1611 = vsel %vm143, %v1610, -inf
    %1612 = vmax.xlane.f32.xlu0 %v1611
    %v1613 = vpop.xlane.xlu0 %1612
    %v1614 = vsub.f32 %v1610, %v1613
    %v1615 = vmul.f32 %v1614, 1.442695
    %v1616 = vpow.pop %v1615
    %v1617 = vsel %vm143, %v1616, 0.0
    %1618 = vadd.xlane.f32.xlu0 %v1617
    %v1619 = vpop.xlane.xlu0 %1618
    %v1620 = vrcp.pop %v1619
    %v1621 = vmul.f32 %v1616, %v1620
    %1622 = vrot.lane.b32.xlu0 %v137, 40
    %v1623 = vpop.permute.xlu0 %1622
    %v1626 = vsel %vm143, %v1621, 0
    %1628 = vmatprep.subr.mxu0 0.0
    %1629 = vmatpush1.msra.mxu0 0.0
    %1630 = vmatprep.subr.mxu0 0.0
    %1631 = vmatpush1.msra.mxu0 0.0
    %1632 = vmatprep.subr.mxu0 0.0
    %1633 = vmatpush1.msra.mxu0 0.0
    %1634 = vmatprep.subr.mxu0 0.0
    %1635 = vmatpush1.msra.mxu0 0.0
    %1636 = vmatprep.subr.mxu0 0.0
    %1637 = vmatpush1.msra.mxu0 0.0
    %1638 = vmatprep.subr.mxu0 0.0
    %1639 = vmatpush1.msra.mxu0 0.0
    %1640 = vmatprep.subr.mxu0 0.0
    %1641 = vmatpush1.msra.mxu0 0.0
    %1642 = vmatprep.subr.mxu0 0.0
    %1643 = vmatpush1.msra.mxu0 0.0
    %1644 = vmatprep.subr.mxu0 0.0
    %1645 = vmatpush1.msra.mxu0 0.0
    %1646 = vmatprep.subr.mxu0 0.0
    %1647 = vmatpush1.msra.mxu0 0.0
    %1648 = vmatprep.subr.mxu0 0.0
    %1649 = vmatpush1.msra.mxu0 0.0
    %1650 = vmatprep.subr.mxu0 0.0
    %1651 = vmatpush1.msra.mxu0 0.0
    %1652 = vmatprep.subr.mxu0 0.0
    %1653 = vmatpush1.msra.mxu0 0.0
    %1654 = vmatprep.subr.mxu0 0.0
    %1655 = vmatpush1.msra.mxu0 0.0
    %1656 = vmatprep.subr.mxu0 0.0
    %1657 = vmatpush1.msra.mxu0 0.0
    %1658 = vmatprep.subr.mxu0 0.0
    %1659 = vmatpush1.msra.mxu0 %v1623
    %1660 = vmatprep.subr.mxu0 0.0
    %1661 = vmatpush2.msra.mxu0 0.0
    %1662 = vmatprep.subr.mxu0 0.0
    %1663 = vmatpush2.msra.mxu0 0.0
    %1664 = vmatprep.subr.mxu0 0.0
    %1665 = vmatpush2.msra.mxu0 0.0
    %1666 = vmatprep.subr.mxu0 0.0
    %1667 = vmatpush2.msra.mxu0 0.0
    %1668 = vmatprep.subr.mxu0 0.0
    %1669 = vmatpush2.msra.mxu0 0.0
    %1670 = vmatprep.subr.mxu0 0.0
    %1671 = vmatpush2.msra.mxu0 0.0
    %1672 = vmatprep.subr.mxu0 0.0
    %1673 = vmatpush2.msra.mxu0 0.0
    %1674 = vmatprep.subr.mxu0 0.0
    %1675 = vmatpush2.msra.mxu0 0.0
    %1676 = vmatprep.subr.mxu0 0.0
    %1677 = vmatpush2.msra.mxu0 0.0
    %1678 = vmatprep.subr.mxu0 0.0
    %1679 = vmatpush2.msra.mxu0 0.0
    %1680 = vmatprep.subr.mxu0 0.0
    %1681 = vmatpush2.msra.mxu0 0.0
    %1682 = vmatprep.subr.mxu0 0.0
    %1683 = vmatpush2.msra.mxu0 0.0
    %1684 = vmatprep.subr.mxu0 0.0
    %1685 = vmatpush2.msra.mxu0 0.0
    %1686 = vmatprep.subr.mxu0 0.0
    %1687 = vmatpush2.msra.mxu0 0.0
    %1688 = vmatprep.subr.mxu0 0.0
    %1689 = vmatpush2.msra.mxu0 0.0
    %1690 = vmatprep.subr.mxu0 0.0
    %1691 = vmatpush2.msra.mxu0 0.0
    %1692 = vmatprep.mubr.f32.mxu0 0.0
    %1693 = vmatmul.mubr.f32.gmra.mxu0 %v1626
    %v1694 = vpop.f32.mrf.mxu0
    %v1695 = vadd.f32 0.0, %v1694
    %v1696 = vpop.f32.mrf.mxu0
    %1697 = vdwg.mxu0
    %1698 = vxpose.xlu0.b32.start [1/16] %v1695, 128
    %1699 = vxpose.xlu0.b32.cont [2/16] 0.0, 128
    %1700 = vxpose.xlu0.b32.cont [3/16] 0.0, 128
    %1701 = vxpose.xlu0.b32.cont [4/16] 0.0, 128
    %1702 = vxpose.xlu0.b32.cont [5/16] 0.0, 128
    %1703 = vxpose.xlu0.b32.cont [6/16] 0.0, 128
    %1704 = vxpose.xlu0.b32.cont [7/16] 0.0, 128
    %1705 = vxpose.xlu0.b32.cont [8/16] 0.0, 128
    %1706 = vxpose.xlu0.b32.cont [9/16] 0.0, 128
    %1707 = vxpose.xlu0.b32.cont [10/16] 0.0, 128
    %1708 = vxpose.xlu0.b32.cont [11/16] 0.0, 128
    %1709 = vxpose.xlu0.b32.cont [12/16] 0.0, 128
    %1710 = vxpose.xlu0.b32.cont [13/16] 0.0, 128
    %1711 = vxpose.xlu0.b32.cont [14/16] 0.0, 128
    %1712 = vxpose.xlu0.b32.cont [15/16] 0.0, 128
    %1713 = vxpose.xlu0.b32.end [16/16] 0.0, 128
    %v1714 = vpop.trf.xlu0
    %v1715 = vpop.trf.xlu0
    %v1716 = vpop.trf.xlu0
    %v1717 = vpop.trf.xlu0
    %v1718 = vpop.trf.xlu0
    %v1719 = vpop.trf.xlu0
    %v1720 = vpop.trf.xlu0
    %v1721 = vpop.trf.xlu0
    %v1722 = vpop.trf.xlu0
    %v1723 = vpop.trf.xlu0
    %v1724 = vpop.trf.xlu0
    %v1725 = vpop.trf.xlu0
    %v1726 = vpop.trf.xlu0
    %v1727 = vpop.trf.xlu0
    %v1728 = vpop.trf.xlu0
    %v1729 = vpop.trf.xlu0
    %1730 = vst.msk [vmem:[#allocation2 + $0x38] sm:$0xff] %vm143, %v1714
    %v1731 = vld [vmem:[#allocation2] ss:$4 sm:$0xff]
    %s1732 = scalar_lea.vmem [#allocation2], 32
    %v1733 = vld [vmem:[%s1732] ss:$4 sm:$0xff]
    %v1734 = vld [vmem:[%s3] sm:$0xff]
    %s1735 = scalar_lea.vmem [#allocation2], 1
    %v1736 = vld [vmem:[%s1735] ss:$4 sm:$0xff]
    %s1737 = scalar_lea.vmem [#allocation2], 33
    %v1738 = vld [vmem:[%s1737] ss:$4 sm:$0xff]
    %s1739 = scalar_lea.vmem %s3, 8
    %v1740 = vld [vmem:[%s1739] sm:$0xff]
    %v1742 = vsel %vm143, %v1736, 0
    %v1745 = vsel %vm143, %v1738, 0
    %1747 = vmatprep.subr.mxu0 0.0
    %1748 = vmatpush1.msra.mxu0 0.0
    %1749 = vmatprep.subr.mxu0 0.0
    %1750 = vmatpush1.msra.mxu0 0.0
    %1751 = vmatprep.subr.mxu0 0.0
    %1752 = vmatpush1.msra.mxu0 0.0
    %1753 = vmatprep.subr.mxu0 0.0
    %1754 = vmatpush1.msra.mxu0 0.0
    %1755 = vmatprep.subr.mxu0 0.0
    %1756 = vmatpush1.msra.mxu0 0.0
    %1757 = vmatprep.subr.mxu0 0.0
    %1758 = vmatpush1.msra.mxu0 0.0
    %1759 = vmatprep.subr.mxu0 0.0
    %1760 = vmatpush1.msra.mxu0 0.0
    %1761 = vmatprep.subr.mxu0 0.0
    %1762 = vmatpush1.msra.mxu0 0.0
    %1763 = vmatprep.subr.mxu0 0.0
    %1764 = vmatpush1.msra.mxu0 0.0
    %1765 = vmatprep.subr.mxu0 0.0
    %1766 = vmatpush1.msra.mxu0 0.0
    %1767 = vmatprep.subr.mxu0 0.0
    %1768 = vmatpush1.msra.mxu0 0.0
    %1769 = vmatprep.subr.mxu0 0.0
    %1770 = vmatpush1.msra.mxu0 0.0
    %1771 = vmatprep.subr.mxu0 0.0
    %1772 = vmatpush1.msra.mxu0 0.0
    %1773 = vmatprep.subr.mxu0 0.0
    %1774 = vmatpush1.msra.mxu0 0.0
    %1775 = vmatprep.subr.mxu0 0.0
    %1776 = vmatpush1.msra.mxu0 0.0
    %1777 = vmatprep.subr.mxu0 0.0
    %1778 = vmatpush1.msra.mxu0 %v1740
    %1779 = vmatprep.subr.mxu0 0.0
    %1780 = vmatpush2.msra.mxu0 0.0
    %1781 = vmatprep.subr.mxu0 0.0
    %1782 = vmatpush2.msra.mxu0 0.0
    %1783 = vmatprep.subr.mxu0 0.0
    %1784 = vmatpush2.msra.mxu0 0.0
    %1785 = vmatprep.subr.mxu0 0.0
    %1786 = vmatpush2.msra.mxu0 0.0
    %1787 = vmatprep.subr.mxu0 0.0
    %1788 = vmatpush2.msra.mxu0 0.0
    %1789 = vmatprep.subr.mxu0 0.0
    %1790 = vmatpush2.msra.mxu0 0.0
    %1791 = vmatprep.subr.mxu0 0.0
    %1792 = vmatpush2.msra.mxu0 0.0
    %1793 = vmatprep.subr.mxu0 0.0
    %1794 = vmatpush2.msra.mxu0 0.0
    %1795 = vmatprep.subr.mxu0 0.0
    %1796 = vmatpush2.msra.mxu0 0.0
    %1797 = vmatprep.subr.mxu0 0.0
    %1798 = vmatpush2.msra.mxu0 0.0
    %1799 = vmatprep.subr.mxu0 0.0
    %1800 = vmatpush2.msra.mxu0 0.0
    %1801 = vmatprep.subr.mxu0 0.0
    %1802 = vmatpush2.msra.mxu0 0.0
    %1803 = vmatprep.subr.mxu0 0.0
    %1804 = vmatpush2.msra.mxu0 0.0
    %1805 = vmatprep.subr.mxu0 0.0
    %1806 = vmatpush2.msra.mxu0 0.0
    %1807 = vmatprep.subr.mxu0 0.0
    %1808 = vmatpush2.msra.mxu0 0.0
    %1809 = vmatprep.subr.mxu0 0.0
    %1810 = vmatpush2.msra.mxu0 0.0
    %1811 = vmatprep.mubr.f32.mxu0 0.0
    %1812 = vmatmul.mubr.f32.gmra.mxu0 %v1742
    %v1813 = vpop.f32.mrf.mxu0
    %v1814 = vadd.f32 0.0, %v1813
    %v1815 = vpop.f32.mrf.mxu0
    %1816 = vmatprep.mubr.f32.mxu0 0.0
    %1817 = vmatmul.mubr.f32.gmra.mxu0 %v1745
    %v1818 = vpop.f32.mrf.mxu0
    %v1819 = vadd.f32 0.0, %v1818
    %v1820 = vpop.f32.mrf.mxu0
    %1821 = vdwg.mxu0
    %v1823 = vsel %vm143, %v1731, 0
    %v1826 = vsel %vm143, %v1733, 0
    %1828 = vmatprep.subr.mxu0 0.0
    %1829 = vmatpush1.msra.mxu0 0.0
    %1830 = vmatprep.subr.mxu0 0.0
    %1831 = vmatpush1.msra.mxu0 0.0
    %1832 = vmatprep.subr.mxu0 0.0
    %1833 = vmatpush1.msra.mxu0 0.0
    %1834 = vmatprep.subr.mxu0 0.0
    %1835 = vmatpush1.msra.mxu0 0.0
    %1836 = vmatprep.subr.mxu0 0.0
    %1837 = vmatpush1.msra.mxu0 0.0
    %1838 = vmatprep.subr.mxu0 0.0
    %1839 = vmatpush1.msra.mxu0 0.0
    %1840 = vmatprep.subr.mxu0 0.0
    %1841 = vmatpush1.msra.mxu0 0.0
    %1842 = vmatprep.subr.mxu0 0.0
    %1843 = vmatpush1.msra.mxu0 0.0
    %1844 = vmatprep.subr.mxu0 0.0
    %1845 = vmatpush1.msra.mxu0 0.0
    %1846 = vmatprep.subr.mxu0 0.0
    %1847 = vmatpush1.msra.mxu0 0.0
    %1848 = vmatprep.subr.mxu0 0.0
    %1849 = vmatpush1.msra.mxu0 0.0
    %1850 = vmatprep.subr.mxu0 0.0
    %1851 = vmatpush1.msra.mxu0 0.0
    %1852 = vmatprep.subr.mxu0 0.0
    %1853 = vmatpush1.msra.mxu0 0.0
    %1854 = vmatprep.subr.mxu0 0.0
    %1855 = vmatpush1.msra.mxu0 0.0
    %1856 = vmatprep.subr.mxu0 0.0
    %1857 = vmatpush1.msra.mxu0 0.0
    %1858 = vmatprep.subr.mxu0 0.0
    %1859 = vmatpush1.msra.mxu0 %v1734
    %1860 = vmatprep.subr.mxu0 0.0
    %1861 = vmatpush2.msra.mxu0 0.0
    %1862 = vmatprep.subr.mxu0 0.0
    %1863 = vmatpush2.msra.mxu0 0.0
    %1864 = vmatprep.subr.mxu0 0.0
    %1865 = vmatpush2.msra.mxu0 0.0
    %1866 = vmatprep.subr.mxu0 0.0
    %1867 = vmatpush2.msra.mxu0 0.0
    %1868 = vmatprep.subr.mxu0 0.0
    %1869 = vmatpush2.msra.mxu0 0.0
    %1870 = vmatprep.subr.mxu0 0.0
    %1871 = vmatpush2.msra.mxu0 0.0
    %1872 = vmatprep.subr.mxu0 0.0
    %1873 = vmatpush2.msra.mxu0 0.0
    %1874 = vmatprep.subr.mxu0 0.0
    %1875 = vmatpush2.msra.mxu0 0.0
    %1876 = vmatprep.subr.mxu0 0.0
    %1877 = vmatpush2.msra.mxu0 0.0
    %1878 = vmatprep.subr.mxu0 0.0
    %1879 = vmatpush2.msra.mxu0 0.0
    %1880 = vmatprep.subr.mxu0 0.0
    %1881 = vmatpush2.msra.mxu0 0.0
    %1882 = vmatprep.subr.mxu0 0.0
    %1883 = vmatpush2.msra.mxu0 0.0
    %1884 = vmatprep.subr.mxu0 0.0
    %1885 = vmatpush2.msra.mxu0 0.0
    %1886 = vmatprep.subr.mxu0 0.0
    %1887 = vmatpush2.msra.mxu0 0.0
    %1888 = vmatprep.subr.mxu0 0.0
    %1889 = vmatpush2.msra.mxu0 0.0
    %1890 = vmatprep.subr.mxu0 0.0
    %1891 = vmatpush2.msra.mxu0 0.0
    %1892 = vmatprep.mubr.f32.mxu0 0.0
    %1893 = vmatmul.mubr.f32.gmra.mxu0 %v1823
    %v1894 = vpop.f32.mrf.mxu0
    %v1895 = vadd.f32 %v1814, %v1894
    %v1896 = vpop.f32.mrf.mxu0
    %1897 = vmatprep.mubr.f32.mxu0 0.0
    %1898 = vmatmul.mubr.f32.gmra.mxu0 %v1826
    %v1899 = vpop.f32.mrf.mxu0
    %v1900 = vadd.f32 %v1819, %v1899
    %v1901 = vpop.f32.mrf.mxu0
    %1902 = vdwg.mxu0
    %s1903 = scalar_lea.vmem [#allocation2], 2
    %v1904 = vld [vmem:[%s1903] ss:$4 sm:$0xff]
    %s1905 = scalar_lea.vmem [#allocation2], 34
    %v1906 = vld [vmem:[%s1905] ss:$4 sm:$0xff]
    %s1907 = scalar_lea.vmem %s3, 16
    %v1908 = vld [vmem:[%s1907] sm:$0xff]
    %v1910 = vsel %vm143, %v1904, 0
    %v1913 = vsel %vm143, %v1906, 0
    %1915 = vmatprep.subr.mxu0 0.0
    %1916 = vmatpush1.msra.mxu0 0.0
    %1917 = vmatprep.subr.mxu0 0.0
    %1918 = vmatpush1.msra.mxu0 0.0
    %1919 = vmatprep.subr.mxu0 0.0
    %1920 = vmatpush1.msra.mxu0 0.0
    %1921 = vmatprep.subr.mxu0 0.0
    %1922 = vmatpush1.msra.mxu0 0.0
    %1923 = vmatprep.subr.mxu0 0.0
    %1924 = vmatpush1.msra.mxu0 0.0
    %1925 = vmatprep.subr.mxu0 0.0
    %1926 = vmatpush1.msra.mxu0 0.0
    %1927 = vmatprep.subr.mxu0 0.0
    %1928 = vmatpush1.msra.mxu0 0.0
    %1929 = vmatprep.subr.mxu0 0.0
    %1930 = vmatpush1.msra.mxu0 0.0
    %1931 = vmatprep.subr.mxu0 0.0
    %1932 = vmatpush1.msra.mxu0 0.0
    %1933 = vmatprep.subr.mxu0 0.0
    %1934 = vmatpush1.msra.mxu0 0.0
    %1935 = vmatprep.subr.mxu0 0.0
    %1936 = vmatpush1.msra.mxu0 0.0
    %1937 = vmatprep.subr.mxu0 0.0
    %1938 = vmatpush1.msra.mxu0 0.0
    %1939 = vmatprep.subr.mxu0 0.0
    %1940 = vmatpush1.msra.mxu0 0.0
    %1941 = vmatprep.subr.mxu0 0.0
    %1942 = vmatpush1.msra.mxu0 0.0
    %1943 = vmatprep.subr.mxu0 0.0
    %1944 = vmatpush1.msra.mxu0 0.0
    %1945 = vmatprep.subr.mxu0 0.0
    %1946 = vmatpush1.msra.mxu0 %v1908
    %1947 = vmatprep.subr.mxu0 0.0
    %1948 = vmatpush2.msra.mxu0 0.0
    %1949 = vmatprep.subr.mxu0 0.0
    %1950 = vmatpush2.msra.mxu0 0.0
    %1951 = vmatprep.subr.mxu0 0.0
    %1952 = vmatpush2.msra.mxu0 0.0
    %1953 = vmatprep.subr.mxu0 0.0
    %1954 = vmatpush2.msra.mxu0 0.0
    %1955 = vmatprep.subr.mxu0 0.0
    %1956 = vmatpush2.msra.mxu0 0.0
    %1957 = vmatprep.subr.mxu0 0.0
    %1958 = vmatpush2.msra.mxu0 0.0
    %1959 = vmatprep.subr.mxu0 0.0
    %1960 = vmatpush2.msra.mxu0 0.0
    %1961 = vmatprep.subr.mxu0 0.0
    %1962 = vmatpush2.msra.mxu0 0.0
    %1963 = vmatprep.subr.mxu0 0.0
    %1964 = vmatpush2.msra.mxu0 0.0
    %1965 = vmatprep.subr.mxu0 0.0
    %1966 = vmatpush2.msra.mxu0 0.0
    %1967 = vmatprep.subr.mxu0 0.0
    %1968 = vmatpush2.msra.mxu0 0.0
    %1969 = vmatprep.subr.mxu0 0.0
    %1970 = vmatpush2.msra.mxu0 0.0
    %1971 = vmatprep.subr.mxu0 0.0
    %1972 = vmatpush2.msra.mxu0 0.0
    %1973 = vmatprep.subr.mxu0 0.0
    %1974 = vmatpush2.msra.mxu0 0.0
    %1975 = vmatprep.subr.mxu0 0.0
    %1976 = vmatpush2.msra.mxu0 0.0
    %1977 = vmatprep.subr.mxu0 0.0
    %1978 = vmatpush2.msra.mxu0 0.0
    %1979 = vmatprep.mubr.f32.mxu0 0.0
    %1980 = vmatmul.mubr.f32.gmra.mxu0 %v1910
    %v1981 = vpop.f32.mrf.mxu0
    %v1982 = vadd.f32 0.0, %v1981
    %v1983 = vpop.f32.mrf.mxu0
    %1984 = vmatprep.mubr.f32.mxu0 0.0
    %1985 = vmatmul.mubr.f32.gmra.mxu0 %v1913
    %v1986 = vpop.f32.mrf.mxu0
    %v1987 = vadd.f32 0.0, %v1986
    %v1988 = vpop.f32.mrf.mxu0
    %1989 = vdwg.mxu0
    %v1990 = vadd.f32 %v1895, %v1982
    %v1991 = vadd.f32 %v1900, %v1987
    %s1992 = scalar_lea.vmem [#allocation2], 3
    %v1993 = vld [vmem:[%s1992] ss:$4 sm:$0xff]
    %s1994 = scalar_lea.vmem [#allocation2], 35
    %v1995 = vld [vmem:[%s1994] ss:$4 sm:$0xff]
    %s1996 = scalar_lea.vmem %s3, 24
    %v1997 = vld [vmem:[%s1996] sm:$0xff]
    %v1999 = vsel %vm143, %v1993, 0
    %v2002 = vsel %vm143, %v1995, 0
    %2004 = vmatprep.subr.mxu0 0.0
    %2005 = vmatpush1.msra.mxu0 0.0
    %2006 = vmatprep.subr.mxu0 0.0
    %2007 = vmatpush1.msra.mxu0 0.0
    %2008 = vmatprep.subr.mxu0 0.0
    %2009 = vmatpush1.msra.mxu0 0.0
    %2010 = vmatprep.subr.mxu0 0.0
    %2011 = vmatpush1.msra.mxu0 0.0
    %2012 = vmatprep.subr.mxu0 0.0
    %2013 = vmatpush1.msra.mxu0 0.0
    %2014 = vmatprep.subr.mxu0 0.0
    %2015 = vmatpush1.msra.mxu0 0.0
    %2016 = vmatprep.subr.mxu0 0.0
    %2017 = vmatpush1.msra.mxu0 0.0
    %2018 = vmatprep.subr.mxu0 0.0
    %2019 = vmatpush1.msra.mxu0 0.0
    %2020 = vmatprep.subr.mxu0 0.0
    %2021 = vmatpush1.msra.mxu0 0.0
    %2022 = vmatprep.subr.mxu0 0.0
    %2023 = vmatpush1.msra.mxu0 0.0
    %2024 = vmatprep.subr.mxu0 0.0
    %2025 = vmatpush1.msra.mxu0 0.0
    %2026 = vmatprep.subr.mxu0 0.0
    %2027 = vmatpush1.msra.mxu0 0.0
    %2028 = vmatprep.subr.mxu0 0.0
    %2029 = vmatpush1.msra.mxu0 0.0
    %2030 = vmatprep.subr.mxu0 0.0
    %2031 = vmatpush1.msra.mxu0 0.0
    %2032 = vmatprep.subr.mxu0 0.0
    %2033 = vmatpush1.msra.mxu0 0.0
    %2034 = vmatprep.subr.mxu0 0.0
    %2035 = vmatpush1.msra.mxu0 %v1997
    %2036 = vmatprep.subr.mxu0 0.0
    %2037 = vmatpush2.msra.mxu0 0.0
    %2038 = vmatprep.subr.mxu0 0.0
    %2039 = vmatpush2.msra.mxu0 0.0
    %2040 = vmatprep.subr.mxu0 0.0
    %2041 = vmatpush2.msra.mxu0 0.0
    %2042 = vmatprep.subr.mxu0 0.0
    %2043 = vmatpush2.msra.mxu0 0.0
    %2044 = vmatprep.subr.mxu0 0.0
    %2045 = vmatpush2.msra.mxu0 0.0
    %2046 = vmatprep.subr.mxu0 0.0
    %2047 = vmatpush2.msra.mxu0 0.0
    %2048 = vmatprep.subr.mxu0 0.0
    %2049 = vmatpush2.msra.mxu0 0.0
    %2050 = vmatprep.subr.mxu0 0.0
    %2051 = vmatpush2.msra.mxu0 0.0
    %2052 = vmatprep.subr.mxu0 0.0
    %2053 = vmatpush2.msra.mxu0 0.0
    %2054 = vmatprep.subr.mxu0 0.0
    %2055 = vmatpush2.msra.mxu0 0.0
    %2056 = vmatprep.subr.mxu0 0.0
    %2057 = vmatpush2.msra.mxu0 0.0
    %2058 = vmatprep.subr.mxu0 0.0
    %2059 = vmatpush2.msra.mxu0 0.0
    %2060 = vmatprep.subr.mxu0 0.0
    %2061 = vmatpush2.msra.mxu0 0.0
    %2062 = vmatprep.subr.mxu0 0.0
    %2063 = vmatpush2.msra.mxu0 0.0
    %2064 = vmatprep.subr.mxu0 0.0
    %2065 = vmatpush2.msra.mxu0 0.0
    %2066 = vmatprep.subr.mxu0 0.0
    %2067 = vmatpush2.msra.mxu0 0.0
    %2068 = vmatprep.mubr.f32.mxu0 0.0
    %2069 = vmatmul.mubr.f32.gmra.mxu0 %v1999
    %v2070 = vpop.f32.mrf.mxu0
    %v2071 = vadd.f32 0.0, %v2070
    %v2072 = vpop.f32.mrf.mxu0
    %2073 = vmatprep.mubr.f32.mxu0 0.0
    %2074 = vmatmul.mubr.f32.gmra.mxu0 %v2002
    %v2075 = vpop.f32.mrf.mxu0
    %v2076 = vadd.f32 0.0, %v2075
    %v2077 = vpop.f32.mrf.mxu0
    %2078 = vdwg.mxu0
    %v2079 = vadd.f32 %v1990, %v2071
    %v2080 = vadd.f32 %v1991, %v2076
    %v2081 = vadd.f32 %v45, %v2079
    %v2082 = vadd.f32 %v46, %v2080
    %v2083 = vld [vmem:[%s4] sm:$0x1]
    %v2085 = vlaneseq
    %v2086 = vshrl.u32 %v2085, 7
    %v2087 = vsub.s32 0, %v2086
    %v2088 = vrot.slane %v2083, %v2087
    %v2090 = vadd.f32 %v2081, %v2088
    %v2091 = vadd.f32 %v2082, %v2088
    %v2092 = vld [vmem:[%s5] sm:$0x1]
    %v2093 = vld [vmem:[%s6] sm:$0x1]
    %v2094 = vsel %vm58, %v2090, 0.0
    %2095 = vadd.xlane.f32.xlu0 %v2094
    %v2096 = vpop.xlane.xlu0 %2095
    %v2097 = vsel %vm58, %v2091, 0.0
    %2098 = vadd.xlane.f32.xlu0 %v2097
    %v2099 = vpop.xlane.xlu0 %2098
    %v2100 = vrcp.pop 32.0
    %v2101 = vmul.f32 %v2096, %v2100
    %v2102 = vmul.f32 %v2099, %v2100
    %v2103 = vsub.f32 %v2090, %v2101
    %v2104 = vsub.f32 %v2091, %v2102
    %v2105 = vmul.f32 %v2103, %v2103
    %v2106 = vmul.f32 %v2104, %v2104
    %v2107 = vsel %vm58, %v2105, 0.0
    %2108 = vadd.xlane.f32.xlu0 %v2107
    %v2109 = vpop.xlane.xlu0 %2108
    %v2110 = vsel %vm58, %v2106, 0.0
    %2111 = vadd.xlane.f32.xlu0 %v2110
    %v2112 = vpop.xlane.xlu0 %2111
    %v2113 = vmul.f32 %v2109, %v2100
    %v2114 = vmul.f32 %v2112, %v2100
    %v2115 = vadd.f32 %v2113, 1e-05
    %v2116 = vadd.f32 %v2114, 1e-05
    %v2117 = vrsqrt.pop %v2115
    %v2118 = vrsqrt.pop %v2116
    %v2119 = vmul.f32 %v2103, %v2117
    %v2120 = vmul.f32 %v2104, %v2118
    %v2122 = vlaneseq
    %v2123 = vshrl.u32 %v2122, 7
    %v2124 = vsub.s32 0, %v2123
    %v2125 = vrot.slane %v2092, %v2124
    %v2127 = vmul.f32 %v2119, %v2125
    %v2128 = vmul.f32 %v2120, %v2125
    %v2130 = vlaneseq
    %v2131 = vshrl.u32 %v2130, 7
    %v2132 = vsub.s32 0, %v2131
    %v2133 = vrot.slane %v2093, %v2132
    %v2135 = vadd.f32 %v2127, %v2133
    %v2136 = vadd.f32 %v2128, %v2133
    %v2137 = vld [vmem:[%s7] sm:$0xff]
    %v2138 = vld [vmem:[%s7 + $0x8] sm:$0xff]
    %v2139 = vld [vmem:[%s7 + $0x10] sm:$0xff]
    %v2140 = vld [vmem:[%s7 + $0x18] sm:$0xff]
    %v2141 = vld [vmem:[%s8] sm:$0x1]
    %v2143 = vlaneseq
    %v2144 = vshrl.u32 %v2143, 7
    %v2145 = vsub.s32 0, %v2144
    %v2146 = vrot.slane %v2141, %v2145
    %v2149 = vsel %vm58, %v2135, 0
    %v2152 = vsel %vm58, %v2136, 0
    %2154 = vmatprep.subr.mxu0 0.0
    %2155 = vmatpush1.msra.mxu0 0.0
    %2156 = vmatprep.subr.mxu0 0.0
    %2157 = vmatpush1.msra.mxu0 0.0
    %2158 = vmatprep.subr.mxu0 0.0
    %2159 = vmatpush1.msra.mxu0 0.0
    %2160 = vmatprep.subr.mxu0 0.0
    %2161 = vmatpush1.msra.mxu0 0.0
    %2162 = vmatprep.subr.mxu0 0.0
    %2163 = vmatpush1.msra.mxu0 0.0
    %2164 = vmatprep.subr.mxu0 0.0
    %2165 = vmatpush1.msra.mxu0 0.0
    %2166 = vmatprep.subr.mxu0 0.0
    %2167 = vmatpush1.msra.mxu0 0.0
    %2168 = vmatprep.subr.mxu0 0.0
    %2169 = vmatpush1.msra.mxu0 0.0
    %2170 = vmatprep.subr.mxu0 0.0
    %2171 = vmatpush1.msra.mxu0 0.0
    %2172 = vmatprep.subr.mxu0 0.0
    %2173 = vmatpush1.msra.mxu0 0.0
    %2174 = vmatprep.subr.mxu0 0.0
    %2175 = vmatpush1.msra.mxu0 0.0
    %2176 = vmatprep.subr.mxu0 0.0
    %2177 = vmatpush1.msra.mxu0 0.0
    %2178 = vmatprep.subr.mxu0 0.0
    %2179 = vmatpush1.msra.mxu0 %v2140
    %2180 = vmatprep.subr.mxu0 0.0
    %2181 = vmatpush1.msra.mxu0 %v2139
    %2182 = vmatprep.subr.mxu0 0.0
    %2183 = vmatpush1.msra.mxu0 %v2138
    %2184 = vmatprep.subr.mxu0 0.0
    %2185 = vmatpush1.msra.mxu0 %v2137
    %2186 = vmatprep.subr.mxu0 0.0
    %2187 = vmatpush2.msra.mxu0 0.0
    %2188 = vmatprep.subr.mxu0 0.0
    %2189 = vmatpush2.msra.mxu0 0.0
    %2190 = vmatprep.subr.mxu0 0.0
    %2191 = vmatpush2.msra.mxu0 0.0
    %2192 = vmatprep.subr.mxu0 0.0
    %2193 = vmatpush2.msra.mxu0 0.0
    %2194 = vmatprep.subr.mxu0 0.0
    %2195 = vmatpush2.msra.mxu0 0.0
    %2196 = vmatprep.subr.mxu0 0.0
    %2197 = vmatpush2.msra.mxu0 0.0
    %2198 = vmatprep.subr.mxu0 0.0
    %2199 = vmatpush2.msra.mxu0 0.0
    %2200 = vmatprep.subr.mxu0 0.0
    %2201 = vmatpush2.msra.mxu0 0.0
    %2202 = vmatprep.subr.mxu0 0.0
    %2203 = vmatpush2.msra.mxu0 0.0
    %2204 = vmatprep.subr.mxu0 0.0
    %2205 = vmatpush2.msra.mxu0 0.0
    %2206 = vmatprep.subr.mxu0 0.0
    %2207 = vmatpush2.msra.mxu0 0.0
    %2208 = vmatprep.subr.mxu0 0.0
    %2209 = vmatpush2.msra.mxu0 0.0
    %2210 = vmatprep.subr.mxu0 0.0
    %2211 = vmatpush2.msra.mxu0 0.0
    %2212 = vmatprep.subr.mxu0 0.0
    %2213 = vmatpush2.msra.mxu0 0.0
    %2214 = vmatprep.subr.mxu0 0.0
    %2215 = vmatpush2.msra.mxu0 0.0
    %2216 = vmatprep.subr.mxu0 0.0
    %2217 = vmatpush2.msra.mxu0 0.0
    %2218 = vmatprep.mubr.f32.mxu0 0.0
    %2219 = vmatmul.mubr.f32.gmra.mxu0 %v2149
    %v2220 = vpop.f32.mrf.mxu0
    %v2221 = vadd.f32 %v2146, %v2220
    %v2222 = vpop.f32.mrf.mxu0
    %2223 = vmatprep.mubr.f32.mxu0 0.0
    %2224 = vmatmul.mubr.f32.gmra.mxu0 %v2152
    %v2225 = vpop.f32.mrf.mxu0
    %v2226 = vadd.f32 %v2146, %v2225
    %v2227 = vpop.f32.mrf.mxu0
    %2228 = vdwg.mxu0
    %v2229 = vmax.f32 %v2221, 0.0
    %v2230 = vmax.f32 %v2226, 0.0
    %v2231 = vld [vmem:[%s9] sm:$0xff]
    %v2232 = vld [vmem:[%s9 + $0x8] sm:$0xff]
    %v2233 = vld [vmem:[%s9 + $0x10] sm:$0xff]
    %v2234 = vld [vmem:[%s9 + $0x18] sm:$0xff]
    %v2235 = vld [vmem:[%s10] sm:$0x1]
    %v2237 = vlaneseq
    %v2238 = vshrl.u32 %v2237, 7
    %v2239 = vsub.s32 0, %v2238
    %v2240 = vrot.slane %v2235, %v2239
    %v2243 = vsel %vm58, %v2229, 0
    %v2246 = vsel %vm58, %v2230, 0
    %2248 = vmatprep.subr.mxu0 0.0
    %2249 = vmatpush1.msra.mxu0 0.0
    %2250 = vmatprep.subr.mxu0 0.0
    %2251 = vmatpush1.msra.mxu0 0.0
    %2252 = vmatprep.subr.mxu0 0.0
    %2253 = vmatpush1.msra.mxu0 0.0
    %2254 = vmatprep.subr.mxu0 0.0
    %2255 = vmatpush1.msra.mxu0 0.0
    %2256 = vmatprep.subr.mxu0 0.0
    %2257 = vmatpush1.msra.mxu0 0.0
    %2258 = vmatprep.subr.mxu0 0.0
    %2259 = vmatpush1.msra.mxu0 0.0
    %2260 = vmatprep.subr.mxu0 0.0
    %2261 = vmatpush1.msra.mxu0 0.0
    %2262 = vmatprep.subr.mxu0 0.0
    %2263 = vmatpush1.msra.mxu0 0.0
    %2264 = vmatprep.subr.mxu0 0.0
    %2265 = vmatpush1.msra.mxu0 0.0
    %2266 = vmatprep.subr.mxu0 0.0
    %2267 = vmatpush1.msra.mxu0 0.0
    %2268 = vmatprep.subr.mxu0 0.0
    %2269 = vmatpush1.msra.mxu0 0.0
    %2270 = vmatprep.subr.mxu0 0.0
    %2271 = vmatpush1.msra.mxu0 0.0
    %2272 = vmatprep.subr.mxu0 0.0
    %2273 = vmatpush1.msra.mxu0 %v2234
    %2274 = vmatprep.subr.mxu0 0.0
    %2275 = vmatpush1.msra.mxu0 %v2233
    %2276 = vmatprep.subr.mxu0 0.0
    %2277 = vmatpush1.msra.mxu0 %v2232
    %2278 = vmatprep.subr.mxu0 0.0
    %2279 = vmatpush1.msra.mxu0 %v2231
    %2280 = vmatprep.subr.mxu0 0.0
    %2281 = vmatpush2.msra.mxu0 0.0
    %2282 = vmatprep.subr.mxu0 0.0
    %2283 = vmatpush2.msra.mxu0 0.0
    %2284 = vmatprep.subr.mxu0 0.0
    %2285 = vmatpush2.msra.mxu0 0.0
    %2286 = vmatprep.subr.mxu0 0.0
    %2287 = vmatpush2.msra.mxu0 0.0
    %2288 = vmatprep.subr.mxu0 0.0
    %2289 = vmatpush2.msra.mxu0 0.0
    %2290 = vmatprep.subr.mxu0 0.0
    %2291 = vmatpush2.msra.mxu0 0.0
    %2292 = vmatprep.subr.mxu0 0.0
    %2293 = vmatpush2.msra.mxu0 0.0
    %2294 = vmatprep.subr.mxu0 0.0
    %2295 = vmatpush2.msra.mxu0 0.0
    %2296 = vmatprep.subr.mxu0 0.0
    %2297 = vmatpush2.msra.mxu0 0.0
    %2298 = vmatprep.subr.mxu0 0.0
    %2299 = vmatpush2.msra.mxu0 0.0
    %2300 = vmatprep.subr.mxu0 0.0
    %2301 = vmatpush2.msra.mxu0 0.0
    %2302 = vmatprep.subr.mxu0 0.0
    %2303 = vmatpush2.msra.mxu0 0.0
    %2304 = vmatprep.subr.mxu0 0.0
    %2305 = vmatpush2.msra.mxu0 0.0
    %2306 = vmatprep.subr.mxu0 0.0
    %2307 = vmatpush2.msra.mxu0 0.0
    %2308 = vmatprep.subr.mxu0 0.0
    %2309 = vmatpush2.msra.mxu0 0.0
    %2310 = vmatprep.subr.mxu0 0.0
    %2311 = vmatpush2.msra.mxu0 0.0
    %2312 = vmatprep.mubr.f32.mxu0 0.0
    %2313 = vmatmul.mubr.f32.gmra.mxu0 %v2243
    %v2314 = vpop.f32.mrf.mxu0
    %v2315 = vadd.f32 %v2240, %v2314
    %v2316 = vpop.f32.mrf.mxu0
    %2317 = vmatprep.mubr.f32.mxu0 0.0
    %2318 = vmatmul.mubr.f32.gmra.mxu0 %v2246
    %v2319 = vpop.f32.mrf.mxu0
    %v2320 = vadd.f32 %v2240, %v2319
    %v2321 = vpop.f32.mrf.mxu0
    %2322 = vdwg.mxu0
    %v2323 = vadd.f32 %v2135, %v2315
    %v2324 = vadd.f32 %v2136, %v2320
    %v2325 = vld [vmem:[%s11] sm:$0x1]
    %v2326 = vld [vmem:[%s12] sm:$0x1]
    %v2327 = vsel %vm58, %v2323, 0.0
    %2328 = vadd.xlane.f32.xlu0 %v2327
    %v2329 = vpop.xlane.xlu0 %2328
    %v2330 = vsel %vm58, %v2324, 0.0
    %2331 = vadd.xlane.f32.xlu0 %v2330
    %v2332 = vpop.xlane.xlu0 %2331
    %v2333 = vmul.f32 %v2329, %v2100
    %v2334 = vmul.f32 %v2332, %v2100
    %v2335 = vsub.f32 %v2323, %v2333
    %v2336 = vsub.f32 %v2324, %v2334
    %v2337 = vmul.f32 %v2335, %v2335
    %v2338 = vmul.f32 %v2336, %v2336
    %v2339 = vsel %vm58, %v2337, 0.0
    %2340 = vadd.xlane.f32.xlu0 %v2339
    %v2341 = vpop.xlane.xlu0 %2340
    %v2342 = vsel %vm58, %v2338, 0.0
    %2343 = vadd.xlane.f32.xlu0 %v2342
    %v2344 = vpop.xlane.xlu0 %2343
    %v2345 = vmul.f32 %v2341, %v2100
    %v2346 = vmul.f32 %v2344, %v2100
    %v2347 = vadd.f32 %v2345, 1e-05
    %v2348 = vadd.f32 %v2346, 1e-05
    %v2349 = vrsqrt.pop %v2347
    %v2350 = vrsqrt.pop %v2348
    %v2351 = vmul.f32 %v2335, %v2349
    %v2352 = vmul.f32 %v2336, %v2350
    %v2354 = vlaneseq
    %v2355 = vshrl.u32 %v2354, 7
    %v2356 = vsub.s32 0, %v2355
    %v2357 = vrot.slane %v2325, %v2356
    %v2359 = vmul.f32 %v2351, %v2357
    %v2360 = vmul.f32 %v2352, %v2357
    %v2362 = vlaneseq
    %v2363 = vshrl.u32 %v2362, 7
    %v2364 = vsub.s32 0, %v2363
    %v2365 = vrot.slane %v2326, %v2364
    %v2367 = vadd.f32 %v2359, %v2365
    %v2368 = vadd.f32 %v2360, %v2365
    %2369 = vst.msk [vmem:[#allocation3] sm:$0xff] %vm58, %v2367
    %2370 = vst.msk [vmem:[#allocation3 + $0x8] sm:$0xff] %vm58, %v2368
    // Predicated region
    $region54: #{gqa_forward.1} parent=1 // pred_check
      _
    $region55: #{gqa_forward.1} parent=1 // pred_check_branch
      %2372 = sbr.rel (0) target = $region57
    $region56: #{gqa_forward.1} parent=1 // pred_region
      %s2374 = ssub.s32 256, 256
      %2375 = vsyncadd [#allocation4], %s2374
      %s2376 = sshll.u32 [#allocation3], 4
      %s2377 = int_to_ptr.vmem [resolvable:$true] %s2376
      %2382 = dma.vmem_to_hbm [thread:$0]  %s2377, 256, %s13, [#allocation4], 128, 128, 8
    $region57: #{gqa_forward.1} parent=1 // pred_fallthru
      _
    // Predicated region
    $region58: #{gqa_forward.1} parent=1 // pred_check
      _
    $region59: #{gqa_forward.1} parent=1 // pred_check_branch
      %2384 = sbr.rel (0) target = $region61
    $region60: #{gqa_forward.1} parent=1 // pred_region
      %2385 = dma.done [#allocation4], 256
    $region61: #{gqa_forward.1} parent=1 // pred_fallthru
      _
    %2386 = vsyncpa [#allocation4], 1

</llo_original>
